<compile_context>
chip_gen: v7x
topology: tpu7x:2x2x1
jax: 0.10.0
libtpu: 0.0.40
codegen_flags: <defaults>
</compile_context>

<pallas_src>
import functools

import jax
import jax.numpy as jnp
from jax import lax
from jax.experimental import pallas as pl
from jax.experimental.pallas import tpu as pltpu


MXU_DTYPE = jnp.bfloat16  # MXU-native operands on v5e/v6e/v7x; f32 accumulation.


# ----------------------------- in-kernel helpers ----------------------------

def _mm(a, b):
    """a @ b with bf16 operands, f32 accumulation."""
    return lax.dot_general(
        a.astype(MXU_DTYPE), b.astype(MXU_DTYPE),
        (((a.ndim - 1,), (0,)), ((), ())),
        preferred_element_type=jnp.float32)


def _mm_nt(a, b):
    """a @ b.T (contract last axes) without an explicit transpose."""
    return lax.dot_general(
        a.astype(MXU_DTYPE), b.astype(MXU_DTYPE),
        (((1,), (1,)), ((), ())),
        preferred_element_type=jnp.float32)


def _gelu_exact(x):
    # PyTorch nn.GELU() default (exact, erf-based), f32 math.
    return 0.5 * x * (1.0 + lax.erf(x * 0.7071067811865476))


def _layernorm(x, g, b, eps):
    mu = jnp.mean(x, axis=-1, keepdims=True)
    xc = x - mu
    var = jnp.mean(xc * xc, axis=-1, keepdims=True)
    return xc * lax.rsqrt(var + eps) * g + b


# ----------------------------- Pallas kernels ------------------------------

def _linear_kernel(x_ref, w_ref, b_ref, o_ref):
    y = _mm(x_ref[...], w_ref[...]) + b_ref[...]
    o_ref[...] = y.astype(o_ref.dtype)


def linear(x, w, b):
    """y = x @ w + b.  x: (N, K), w: (K, M), b: (M,)."""
    N, K = x.shape
    K2, M = w.shape
    assert K == K2
    return pl.pallas_call(
        _linear_kernel,
        out_shape=jax.ShapeDtypeStruct((N, M), x.dtype),
        grid=(1,),
        in_specs=[
            pl.BlockSpec((N, K), lambda i: (0, 0)),
            pl.BlockSpec((K, M), lambda i: (0, 0)),
            pl.BlockSpec((1, M), lambda i: (0, 0)),
        ],
        out_specs=pl.BlockSpec((N, M), lambda i: (0, 0)),
    )(x, w, b.reshape(1, M))


def _block_kernel(x_ref,
                  ln1_g, ln1_b, qkv_w, qkv_b, proj_w, proj_b,
                  ln2_g, ln2_b, fc1_w, fc1_b, fc2_w, fc2_b,
                  o_ref, *, num_heads, seq_len, eps):
    """One fused pre-norm transformer block for a single batch element."""
    x = x_ref[0].astype(jnp.float32)                     # (Tp, D)
    Tp, D = x.shape
    dh = D // num_heads
    scale = dh ** -0.5

    # --- attention sub-block -------------------------------------------------
    h = _layernorm(x, ln1_g[...], ln1_b[...], eps)
    qkv = _mm(h, qkv_w[...]) + qkv_b[...]                # (Tp, 3D), f32

    # mask out padded key rows (rows >= seq_len are zero-padding)
    key_ok = lax.broadcasted_iota(jnp.int32, (Tp, Tp), 1) < seq_len

    heads = []
    for hi in range(num_heads):                          # static unroll, all heads
        qh = qkv[:, hi * dh:(hi + 1) * dh]               # (Tp, dh)
        kh = qkv[:, D + hi * dh:D + (hi + 1) * dh]
        vh = qkv[:, 2 * D + hi * dh:2 * D + (hi + 1) * dh]
        s = _mm_nt(qh, kh) * scale                       # (Tp, Tp) f32
        s = jnp.where(key_ok, s, -1e30)
        m = jnp.max(s, axis=-1, keepdims=True)
        e = jnp.exp(s - m)
        inv = pl.reciprocal(jnp.sum(e, axis=-1, keepdims=True), approx=True)
        p = e * inv
        heads.append(_mm(p, vh))                         # (Tp, dh)
    attn = jnp.concatenate(heads, axis=-1)               # (Tp, D)

    x = x + _mm(attn, proj_w[...]) + proj_b[...]         # residual 1

    # --- MLP sub-block -------------------------------------------------------
    h2 = _layernorm(x, ln2_g[...], ln2_b[...], eps)
    m1 = _gelu_exact(_mm(h2, fc1_w[...]) + fc1_b[...])
    x = x + _mm(m1, fc2_w[...]) + fc2_b[...]             # residual 2

    o_ref[0] = x.astype(o_ref.dtype)


def transformer_block(xseq, blk, *, num_heads, seq_len, eps=1e-6):
    """xseq: (B2, Tp, D) padded sequence.  One pallas_call per block."""
    B2, Tp, D = xseq.shape
    Hd = blk["fc1_w"].shape[1]

    def rep(shape):
        n = len(shape)
        return pl.BlockSpec(shape, lambda b: (0,) * n)

    kernel = functools.partial(_block_kernel, num_heads=num_heads,
                               seq_len=seq_len, eps=eps)
    xspec = pl.BlockSpec((1, Tp, D), lambda b: (b, 0, 0))
    return pl.pallas_call(
        kernel,
        out_shape=jax.ShapeDtypeStruct((B2, Tp, D), xseq.dtype),
        grid=(B2,),
        in_specs=[
            xspec,
            rep((1, D)), rep((1, D)),
            rep((D, 3 * D)), rep((1, 3 * D)),
            rep((D, D)), rep((1, D)),
            rep((1, D)), rep((1, D)),
            rep((D, Hd)), rep((1, Hd)),
            rep((Hd, D)), rep((1, D)),
        ],
        out_specs=xspec,
        compiler_params=pltpu.CompilerParams(
            dimension_semantics=("parallel",)),
    )(xseq,
      blk["ln1_g"].reshape(1, D), blk["ln1_b"].reshape(1, D),
      blk["qkv_w"], blk["qkv_b"].reshape(1, 3 * D),
      blk["proj_w"], blk["proj_b"].reshape(1, D),
      blk["ln2_g"].reshape(1, D), blk["ln2_b"].reshape(1, D),
      blk["fc1_w"], blk["fc1_b"].reshape(1, Hd),
      blk["fc2_w"], blk["fc2_b"].reshape(1, D))


def _head_kernel(x_ref, ng, nb, w1, b1, w2, b2, o_ref, *, eps):
    x = x_ref[...].astype(jnp.float32)                   # (B2, D) cls tokens
    h = _layernorm(x, ng[...], nb[...], eps)             # final encoder norm
    h = _gelu_exact(_mm(h, w1[...]) + b1[...])           # head fc1 + GELU
    o = _mm(h, w2[...]) + b2[...]                        # head fc2
    o_ref[...] = o.astype(o_ref.dtype)


def head(cls_rows, params, eps=1e-6):
    B2, D = cls_rows.shape
    out_dim = params["head_fc2_w"].shape[1]
    kernel = functools.partial(_head_kernel, eps=eps)
    return pl.pallas_call(
        kernel,
        out_shape=jax.ShapeDtypeStruct((B2, out_dim), cls_rows.dtype),
        grid=(1,),
        in_specs=[
            pl.BlockSpec((B2, D), lambda i: (0, 0)),
            pl.BlockSpec((1, D), lambda i: (0, 0)),
            pl.BlockSpec((1, D), lambda i: (0, 0)),
            pl.BlockSpec((D, D), lambda i: (0, 0)),
            pl.BlockSpec((1, D), lambda i: (0, 0)),
            pl.BlockSpec((D, out_dim), lambda i: (0, 0)),
            pl.BlockSpec((1, out_dim), lambda i: (0, 0)),
        ],
        out_specs=pl.BlockSpec((B2, out_dim), lambda i: (0, 0)),
    )(cls_rows,
      params["norm_g"].reshape(1, D), params["norm_b"].reshape(1, D),
      params["head_fc1_w"], params["head_fc1_b"].reshape(1, D),
      params["head_fc2_w"], params["head_fc2_b"].reshape(1, out_dim))


# ----------------------------- parameter init ------------------------------
# TODO(synk): the timm `vit_small_patch16` backbone is replaced by a
# structurally-equivalent tiny ViT (patch embed -> pre-norm attn/MLP blocks ->
# final LN (eps=1e-6, timm default) -> cls-token pooling) with deterministic
# synthetic weights; no pretrained checkpoint is loaded.

def _w(key, shape):
    return 0.02 * jax.random.normal(key, shape, dtype=jnp.float32)


def init_params(key, *, in_chans, patch, embed_dim, depth, num_heads,
                mlp_ratio, num_patches, out_dim):
    D = embed_dim
    H = D * mlp_ratio
    T = num_patches + 1
    keys = iter(jax.random.split(key, 8 + 8 * depth))
    params = {
        "patch_w": _w(next(keys), (in_chans * patch * patch, D)),
        "patch_b": jnp.zeros((D,), jnp.float32),
        "cls_token": _w(next(keys), (1, 1, D)),
        "pos_embed": _w(next(keys), (1, T, D)),
        "norm_g": jnp.ones((D,), jnp.float32),
        "norm_b": jnp.zeros((D,), jnp.float32),
        # head Mlp: hidden defaults to in_features, out = out_dim
        "head_fc1_w": _w(next(keys), (D, D)),
        "head_fc1_b": jnp.zeros((D,), jnp.float32),
        "head_fc2_w": _w(next(keys), (D, out_dim)),
        "head_fc2_b": jnp.zeros((out_dim,), jnp.float32),
        "blocks": [],
    }
    for _ in range(depth):
        blk = {
            "ln1_g": jnp.ones((D,), jnp.float32),
            "ln1_b": jnp.zeros((D,), jnp.float32),
            "qkv_w": _w(next(keys), (D, 3 * D)),
            "qkv_b": jnp.zeros((3 * D,), jnp.float32),
            "proj_w": _w(next(keys), (D, D)),
            "proj_b": jnp.zeros((D,), jnp.float32),
            "ln2_g": jnp.ones((D,), jnp.float32),
            "ln2_b": jnp.zeros((D,), jnp.float32),
            "fc1_w": _w(next(keys), (D, H)),
            "fc1_b": jnp.zeros((H,), jnp.float32),
            "fc2_w": _w(next(keys), (H, D)),
            "fc2_b": jnp.zeros((D,), jnp.float32),
        }
        params["blocks"].append(blk)
    return params


# ------------------------------ forward pass -------------------------------

def det_model_forward(params, x, *, patch, num_heads):
    B, C, H, W = x.shape
    # Encoder: split channels into two "views": (2B, C//2, H, W)
    x = x.reshape(2 * B, C // 2, H, W)
    B2, Cc, _, _ = x.shape
    p = patch
    Hp, Wp = H // p, W // p
    P = Hp * Wp

    # --- patch embedding (conv k=p, s=p  ==  patch-flatten + matmul) ---
    patches = (x.reshape(B2, Cc, Hp, p, Wp, p)
                 .transpose(0, 2, 4, 1, 3, 5)
                 .reshape(B2 * P, Cc * p * p))
    tok = linear(patches, params["patch_w"], params["patch_b"])       # (B2*P, D)
    D = tok.shape[-1]
    tok = tok.reshape(B2, P, D)

    # --- cls token + pos embed, pad sequence to a multiple of 8 rows ---
    cls = jnp.broadcast_to(params["cls_token"], (B2, 1, D))
    xseq = jnp.concatenate([cls, tok], axis=1) + params["pos_embed"]   # (B2, T, D)
    T = P + 1
    Tp = ((T + 7) // 8) * 8
    xseq = jnp.pad(xseq, ((0, 0), (0, Tp - T), (0, 0)))                # (B2, Tp, D)

    # --- fused transformer blocks (one pallas_call per block) ---
    for blk in params["blocks"]:
        xseq = transformer_block(xseq, blk, num_heads=num_heads, seq_len=T)

    # --- final norm + cls pooling + DetModel head, fused (LN is row-wise) ---
    cls_rows = xseq[:, 0, :]                                           # (2B, D)
    out = head(cls_rows, params)                                       # (2B, out_dim)
    return out.reshape(B, -1)                                          # (B, 2*out_dim)


# ---------------------------------- main ------------------------------------

if __name__ == "__main__":
    B, C, H, W = 2, 4, 16, 16          # input NCHW
    PATCH = 4
    EMBED_DIM = 32
    DEPTH = 2
    NUM_HEADS = 2
    MLP_RATIO = 4
    OUT_DIM = 8
    NUM_PATCHES = (H // PATCH) * (W // PATCH)

    key = jax.random.PRNGKey(0)
    kx, kp = jax.random.split(key)
    x = jax.random.normal(kx, (B, C, H, W), dtype=jnp.float32)
    params = init_params(
        kp,
        in_chans=C // 2,
        patch=PATCH,
        embed_dim=EMBED_DIM,
        depth=DEPTH,
        num_heads=NUM_HEADS,
        mlp_ratio=MLP_RATIO,
        num_patches=NUM_PATCHES,
        out_dim=OUT_DIM,
    )

    fwd = jax.jit(functools.partial(det_model_forward, patch=PATCH, num_heads=NUM_HEADS))
    out = fwd(params, x)
    out = jax.block_until_ready(out)
    assert out.shape == (B, 2 * OUT_DIM), out.shape
    print("KERNEL_OK")
</pallas_src>

<mosaic_0001>
module attributes {stable_mosaic.version = 11 : i64} {
  func.func @_linear_kernel(%arg0: i32, %arg1: memref<64x32xf32, #tpu.memory_space<vmem>>, %arg2: memref<32x32xf32, #tpu.memory_space<vmem>>, %arg3: memref<1x32xf32, #tpu.memory_space<vmem>>, %arg4: memref<64x32xf32, #tpu.memory_space<vmem>>) attributes {dimension_semantics = [#tpu.dimension_semantics<arbitrary>], iteration_bounds = array<i64: 1>, scalar_prefetch = 0 : i64, scratch_operands = 0 : i64, tpu.core_type = #tpu.core_type<tc>, window_params = [{pipeline_mode = #tpu.pipeline_mode<synchronous>, transform_indices = @transform_0, window_bounds = array<i64: 64, 32>}, {pipeline_mode = #tpu.pipeline_mode<synchronous>, transform_indices = @transform_1, window_bounds = array<i64: 32, 32>}, {pipeline_mode = #tpu.pipeline_mode<synchronous>, transform_indices = @transform_2, window_bounds = array<i64: 1, 32>}, {pipeline_mode = #tpu.pipeline_mode<synchronous>, transform_indices = @transform_3, window_bounds = array<i64: 64, 32>}]} {
    %c0 = arith.constant 0 : index
    %c0_0 = arith.constant 0 : index
    %0 = vector.load %arg1[%c0, %c0_0] : memref<64x32xf32, #tpu.memory_space<vmem>>, vector<64x32xf32>
    %c0_1 = arith.constant 0 : index
    %c0_2 = arith.constant 0 : index
    %1 = vector.load %arg2[%c0_1, %c0_2] : memref<32x32xf32, #tpu.memory_space<vmem>>, vector<32x32xf32>
    %2 = arith.truncf %0 : vector<64x32xf32> to vector<64x32xbf16>
    %3 = arith.truncf %1 : vector<32x32xf32> to vector<32x32xbf16>
    %cst = arith.constant dense<0.000000e+00> : vector<64x32xf32>
    %4 = tpu.matmul %2, %3, %cst {dimension_numbers = #tpu.dot_dimension_numbers<[1], [0], [0], [1], [0, 0, 1, 1], [], []>} : vector<64x32xbf16>, vector<32x32xbf16>, vector<64x32xf32> -> vector<64x32xf32>
    %c0_3 = arith.constant 0 : index
    %c0_4 = arith.constant 0 : index
    %5 = vector.load %arg3[%c0_3, %c0_4] : memref<1x32xf32, #tpu.memory_space<vmem>>, vector<1x32xf32>
    %6 = vector.broadcast %5 : vector<1x32xf32> to vector<64x32xf32>
    %7 = arith.addf %4, %6 : vector<64x32xf32>
    %c0_5 = arith.constant 0 : index
    %c0_6 = arith.constant 0 : index
    %8 = vector.load %arg4[%c0_5, %c0_6] : memref<64x32xf32, #tpu.memory_space<vmem>>, vector<64x32xf32>
    tpu.vector_store %arg4[%c0_5, %c0_6], %7 {strides = array<i32>} : memref<64x32xf32, #tpu.memory_space<vmem>>, vector<64x32xf32>,
    return
  }
  func.func @transform_0(%arg0: i32) -> (i32, i32) {
    %c0_i32 = arith.constant 0 : i32
    %c0_i32_0 = arith.constant 0 : i32
    %c0_i32_1 = arith.constant 0 : i32
    return %c0_i32, %c0_i32_0 : i32, i32
  }
  func.func @transform_1(%arg0: i32) -> (i32, i32) {
    %c0_i32 = arith.constant 0 : i32
    %c0_i32_0 = arith.constant 0 : i32
    %c0_i32_1 = arith.constant 0 : i32
    return %c0_i32, %c0_i32_0 : i32, i32
  }
  func.func @transform_2(%arg0: i32) -> (i32, i32) {
    %c0_i32 = arith.constant 0 : i32
    %c0_i32_0 = arith.constant 0 : i32
    %c0_i32_1 = arith.constant 0 : i32
    return %c0_i32, %c0_i32_0 : i32, i32
  }
  func.func @transform_3(%arg0: i32) -> (i32, i32) {
    %c0_i32 = arith.constant 0 : i32
    %c0_i32_0 = arith.constant 0 : i32
    %c0_i32_1 = arith.constant 0 : i32
    return %c0_i32, %c0_i32_0 : i32, i32
  }
}

module attributes {stable_mosaic.version = 11 : i64} {
  func.func @_block_kernel(%arg0: i32, %arg1: memref<1x24x32xf32, #tpu.memory_space<vmem>>, %arg2: memref<1x32xf32, #tpu.memory_space<vmem>>, %arg3: memref<1x32xf32, #tpu.memory_space<vmem>>, %arg4: memref<32x96xf32, #tpu.memory_space<vmem>>, %arg5: memref<1x96xf32, #tpu.memory_space<vmem>>, %arg6: memref<32x32xf32, #tpu.memory_space<vmem>>, %arg7: memref<1x32xf32, #tpu.memory_space<vmem>>, %arg8: memref<1x32xf32, #tpu.memory_space<vmem>>, %arg9: memref<1x32xf32, #tpu.memory_space<vmem>>, %arg10: memref<32x128xf32, #tpu.memory_space<vmem>>, %arg11: memref<1x128xf32, #tpu.memory_space<vmem>>, %arg12: memref<128x32xf32, #tpu.memory_space<vmem>>, %arg13: memref<1x32xf32, #tpu.memory_space<vmem>>, %arg14: memref<1x24x32xf32, #tpu.memory_space<vmem>>) attributes {dimension_semantics = [#tpu.dimension_semantics<parallel>], iteration_bounds = array<i64: 4>, scalar_prefetch = 0 : i64, scratch_operands = 0 : i64, tpu.core_type = #tpu.core_type<tc>, window_params = [{transform_indices = @transform_0, window_bounds = array<i64: 1, 24, 32>}, {pipeline_mode = #tpu.pipeline_mode<synchronous>, transform_indices = @transform_1, window_bounds = array<i64: 1, 32>}, {pipeline_mode = #tpu.pipeline_mode<synchronous>, transform_indices = @transform_2, window_bounds = array<i64: 1, 32>}, {pipeline_mode = #tpu.pipeline_mode<synchronous>, transform_indices = @transform_3, window_bounds = array<i64: 32, 96>}, {pipeline_mode = #tpu.pipeline_mode<synchronous>, transform_indices = @transform_4, window_bounds = array<i64: 1, 96>}, {pipeline_mode = #tpu.pipeline_mode<synchronous>, transform_indices = @transform_5, window_bounds = array<i64: 32, 32>}, {pipeline_mode = #tpu.pipeline_mode<synchronous>, transform_indices = @transform_6, window_bounds = array<i64: 1, 32>}, {pipeline_mode = #tpu.pipeline_mode<synchronous>, transform_indices = @transform_7, window_bounds = array<i64: 1, 32>}, {pipeline_mode = #tpu.pipeline_mode<synchronous>, transform_indices = @transform_8, window_bounds = array<i64: 1, 32>}, {pipeline_mode = #tpu.pipeline_mode<synchronous>, transform_indices = @transform_9, window_bounds = array<i64: 32, 128>}, {pipeline_mode = #tpu.pipeline_mode<synchronous>, transform_indices = @transform_10, window_bounds = array<i64: 1, 128>}, {pipeline_mode = #tpu.pipeline_mode<synchronous>, transform_indices = @transform_11, window_bounds = array<i64: 128, 32>}, {pipeline_mode = #tpu.pipeline_mode<synchronous>, transform_indices = @transform_12, window_bounds = array<i64: 1, 32>}, {transform_indices = @transform_13, window_bounds = array<i64: 1, 24, 32>}]} {
    %c0 = arith.constant 0 : index
    %c0_0 = arith.constant 0 : index
    %c0_1 = arith.constant 0 : index
    %0 = vector.load %arg1[%c0, %c0_0, %c0_1] : memref<1x24x32xf32, #tpu.memory_space<vmem>>, vector<1x24x32xf32>
    %1 = vector.shape_cast %0 : vector<1x24x32xf32> to vector<24x32xf32>
    %c0_2 = arith.constant 0 : index
    %c0_3 = arith.constant 0 : index
    %2 = vector.load %arg2[%c0_2, %c0_3] : memref<1x32xf32, #tpu.memory_space<vmem>>, vector<1x32xf32>
    %c0_4 = arith.constant 0 : index
    %c0_5 = arith.constant 0 : index
    %3 = vector.load %arg3[%c0_4, %c0_5] : memref<1x32xf32, #tpu.memory_space<vmem>>, vector<1x32xf32>
    %cst = arith.constant dense<0.000000e+00> : vector<24xf32>
    %4 = vector.multi_reduction <add>, %1, %cst [1] : vector<24x32xf32> to vector<24xf32>
    %5 = vector.shape_cast %4 : vector<24xf32> to vector<24x1xf32>
    %cst_6 = arith.constant 3.200000e+01 : f32
    %6 = vector.broadcast %cst_6 : f32 to vector<24x1xf32>
    %7 = arith.divf %5, %6 : vector<24x1xf32>
    %8 = vector.broadcast %7 : vector<24x1xf32> to vector<24x32xf32>
    %9 = arith.subf %1, %8 : vector<24x32xf32>
    %10 = arith.mulf %9, %9 : vector<24x32xf32>
    %cst_7 = arith.constant dense<0.000000e+00> : vector<24xf32>
    %11 = vector.multi_reduction <add>, %10, %cst_7 [1] : vector<24x32xf32> to vector<24xf32>
    %12 = vector.shape_cast %11 : vector<24xf32> to vector<24x1xf32>
    %cst_8 = arith.constant 3.200000e+01 : f32
    %13 = vector.broadcast %cst_8 : f32 to vector<24x1xf32>
    %14 = arith.divf %12, %13 : vector<24x1xf32>
    %cst_9 = arith.constant 9.99999997E-7 : f32
    %15 = vector.broadcast %cst_9 : f32 to vector<24x1xf32>
    %16 = arith.addf %14, %15 : vector<24x1xf32>
    %17 = math.rsqrt %16 : vector<24x1xf32>
    %18 = vector.broadcast %17 : vector<24x1xf32> to vector<24x32xf32>
    %19 = arith.mulf %9, %18 : vector<24x32xf32>
    %20 = vector.broadcast %2 : vector<1x32xf32> to vector<24x32xf32>
    %21 = arith.mulf %19, %20 : vector<24x32xf32>
    %22 = vector.broadcast %3 : vector<1x32xf32> to vector<24x32xf32>
    %23 = arith.addf %21, %22 : vector<24x32xf32>
    %c0_10 = arith.constant 0 : index
    %c0_11 = arith.constant 0 : index
    %24 = vector.load %arg4[%c0_10, %c0_11] : memref<32x96xf32, #tpu.memory_space<vmem>>, vector<32x96xf32>
    %25 = arith.truncf %23 : vector<24x32xf32> to vector<24x32xbf16>
    %26 = arith.truncf %24 : vector<32x96xf32> to vector<32x96xbf16>
    %cst_12 = arith.constant dense<0.000000e+00> : vector<24x96xf32>
    %27 = tpu.matmul %25, %26, %cst_12 {dimension_numbers = #tpu.dot_dimension_numbers<[1], [0], [0], [1], [0, 0, 1, 1], [], []>} : vector<24x32xbf16>, vector<32x96xbf16>, vector<24x96xf32> -> vector<24x96xf32>
    %c0_13 = arith.constant 0 : index
    %c0_14 = arith.constant 0 : index
    %28 = vector.load %arg5[%c0_13, %c0_14] : memref<1x96xf32, #tpu.memory_space<vmem>>, vector<1x96xf32>
    %29 = vector.broadcast %28 : vector<1x96xf32> to vector<24x96xf32>
    %30 = arith.addf %27, %29 : vector<24x96xf32>
    %31 = tpu.iota {dimensions = array<i32: 1>} : vector<24x24xi32>
    %c17_i32 = arith.constant 17 : i32
    %32 = vector.broadcast %c17_i32 : i32 to vector<24x24xi32>
    %33 = arith.cmpi slt, %31, %32 : vector<24x24xi32>
    %34 = vector.extract_strided_slice %30 {offsets = [0, 0], sizes = [24, 16], strides = [1, 1]} : vector<24x96xf32> to vector<24x16xf32>
    %35 = vector.extract_strided_slice %30 {offsets = [0, 32], sizes = [24, 16], strides = [1, 1]} : vector<24x96xf32> to vector<24x16xf32>
    %36 = vector.extract_strided_slice %30 {offsets = [0, 64], sizes = [24, 16], strides = [1, 1]} : vector<24x96xf32> to vector<24x16xf32>
    %37 = arith.truncf %34 : vector<24x16xf32> to vector<24x16xbf16>
    %38 = arith.truncf %35 : vector<24x16xf32> to vector<24x16xbf16>
    %cst_15 = arith.constant dense<0.000000e+00> : vector<24x24xf32>
    %39 = tpu.matmul %37, %38, %cst_15 {dimension_numbers = #tpu.dot_dimension_numbers<[1], [1], [0], [0], [0, 0, 1, 0], [], []>} : vector<24x16xbf16>, vector<24x16xbf16>, vector<24x24xf32> -> vector<24x24xf32>
    %cst_16 = arith.constant 2.500000e-01 : f32
    %40 = vector.broadcast %cst_16 : f32 to vector<24x24xf32>
    %41 = arith.mulf %39, %40 : vector<24x24xf32>
    %cst_17 = arith.constant -1.000000e+30 : f32
    %42 = vector.broadcast %cst_17 : f32 to vector<24x24xf32>
    %43 = arith.select %33, %41, %42 : vector<24x24xi1>, vector<24x24xf32>
    %cst_18 = arith.constant dense<0xFF800000> : vector<24xf32>
    %44 = vector.multi_reduction <maximumf>, %43, %cst_18 [1] : vector<24x24xf32> to vector<24xf32>
    %45 = vector.shape_cast %44 : vector<24xf32> to vector<24x1xf32>
    %46 = vector.broadcast %45 : vector<24x1xf32> to vector<24x24xf32>
    %47 = arith.subf %43, %46 : vector<24x24xf32>
    %48 = math.exp %47 : vector<24x24xf32>
    %cst_19 = arith.constant dense<0.000000e+00> : vector<24xf32>
    %49 = vector.multi_reduction <add>, %48, %cst_19 [1] : vector<24x24xf32> to vector<24xf32>
    %50 = vector.shape_cast %49 : vector<24xf32> to vector<24x1xf32>
    %51 = tpu.reciprocal %50 {approx = true} : vector<24x1xf32> -> vector<24x1xf32>
    %52 = vector.broadcast %51 : vector<24x1xf32> to vector<24x24xf32>
    %53 = arith.mulf %48, %52 : vector<24x24xf32>
    %54 = arith.truncf %53 : vector<24x24xf32> to vector<24x24xbf16>
    %55 = arith.truncf %36 : vector<24x16xf32> to vector<24x16xbf16>
    %cst_20 = arith.constant dense<0.000000e+00> : vector<24x16xf32>
    %56 = tpu.matmul %54, %55, %cst_20 {dimension_numbers = #tpu.dot_dimension_numbers<[1], [0], [0], [1], [0, 0, 1, 1], [], []>} : vector<24x24xbf16>, vector<24x16xbf16>, vector<24x16xf32> -> vector<24x16xf32>
    %57 = vector.extract_strided_slice %30 {offsets = [0, 16], sizes = [24, 16], strides = [1, 1]} : vector<24x96xf32> to vector<24x16xf32>
    %58 = vector.extract_strided_slice %30 {offsets = [0, 48], sizes = [24, 16], strides = [1, 1]} : vector<24x96xf32> to vector<24x16xf32>
    %59 = vector.extract_strided_slice %30 {offsets = [0, 80], sizes = [24, 16], strides = [1, 1]} : vector<24x96xf32> to vector<24x16xf32>
    %60 = arith.truncf %57 : vector<24x16xf32> to vector<24x16xbf16>
    %61 = arith.truncf %58 : vector<24x16xf32> to vector<24x16xbf16>
    %cst_21 = arith.constant dense<0.000000e+00> : vector<24x24xf32>
    %62 = tpu.matmul %60, %61, %cst_21 {dimension_numbers = #tpu.dot_dimension_numbers<[1], [1], [0], [0], [0, 0, 1, 0], [], []>} : vector<24x16xbf16>, vector<24x16xbf16>, vector<24x24xf32> -> vector<24x24xf32>
    %cst_22 = arith.constant 2.500000e-01 : f32
    %63 = vector.broadcast %cst_22 : f32 to vector<24x24xf32>
    %64 = arith.mulf %62, %63 : vector<24x24xf32>
    %cst_23 = arith.constant -1.000000e+30 : f32
    %65 = vector.broadcast %cst_23 : f32 to vector<24x24xf32>
    %66 = arith.select %33, %64, %65 : vector<24x24xi1>, vector<24x24xf32>
    %cst_24 = arith.constant dense<0xFF800000> : vector<24xf32>
    %67 = vector.multi_reduction <maximumf>, %66, %cst_24 [1] : vector<24x24xf32> to vector<24xf32>
    %68 = vector.shape_cast %67 : vector<24xf32> to vector<24x1xf32>
    %69 = vector.broadcast %68 : vector<24x1xf32> to vector<24x24xf32>
    %70 = arith.subf %66, %69 : vector<24x24xf32>
    %71 = math.exp %70 : vector<24x24xf32>
    %cst_25 = arith.constant dense<0.000000e+00> : vector<24xf32>
    %72 = vector.multi_reduction <add>, %71, %cst_25 [1] : vector<24x24xf32> to vector<24xf32>
    %73 = vector.shape_cast %72 : vector<24xf32> to vector<24x1xf32>
    %74 = tpu.reciprocal %73 {approx = true} : vector<24x1xf32> -> vector<24x1xf32>
    %75 = vector.broadcast %74 : vector<24x1xf32> to vector<24x24xf32>
    %76 = arith.mulf %71, %75 : vector<24x24xf32>
    %77 = arith.truncf %76 : vector<24x24xf32> to vector<24x24xbf16>
    %78 = arith.truncf %59 : vector<24x16xf32> to vector<24x16xbf16>
    %cst_26 = arith.constant dense<0.000000e+00> : vector<24x16xf32>
    %79 = tpu.matmul %77, %78, %cst_26 {dimension_numbers = #tpu.dot_dimension_numbers<[1], [0], [0], [1], [0, 0, 1, 1], [], []>} : vector<24x24xbf16>, vector<24x16xbf16>, vector<24x16xf32> -> vector<24x16xf32>
    %80 = tpu.concatenate %56, %79 in 1 : vector<24x16xf32>, vector<24x16xf32> -> vector<24x32xf32>
    %c0_27 = arith.constant 0 : index
    %c0_28 = arith.constant 0 : index
    %81 = vector.load %arg6[%c0_27, %c0_28] : memref<32x32xf32, #tpu.memory_space<vmem>>, vector<32x32xf32>
    %82 = arith.truncf %80 : vector<24x32xf32> to vector<24x32xbf16>
    %83 = arith.truncf %81 : vector<32x32xf32> to vector<32x32xbf16>
    %cst_29 = arith.constant dense<0.000000e+00> : vector<24x32xf32>
    %84 = tpu.matmul %82, %83, %cst_29 {dimension_numbers = #tpu.dot_dimension_numbers<[1], [0], [0], [1], [0, 0, 1, 1], [], []>} : vector<24x32xbf16>, vector<32x32xbf16>, vector<24x32xf32> -> vector<24x32xf32>
    %85 = arith.addf %1, %84 : vector<24x32xf32>
    %c0_30 = arith.constant 0 : index
    %c0_31 = arith.constant 0 : index
    %86 = vector.load %arg7[%c0_30, %c0_31] : memref<1x32xf32, #tpu.memory_space<vmem>>, vector<1x32xf32>
    %87 = vector.broadcast %86 : vector<1x32xf32> to vector<24x32xf32>
    %88 = arith.addf %85, %87 : vector<24x32xf32>
    %c0_32 = arith.constant 0 : index
    %c0_33 = arith.constant 0 : index
    %89 = vector.load %arg8[%c0_32, %c0_33] : memref<1x32xf32, #tpu.memory_space<vmem>>, vector<1x32xf32>
    %c0_34 = arith.constant 0 : index
    %c0_35 = arith.constant 0 : index
    %90 = vector.load %arg9[%c0_34, %c0_35] : memref<1x32xf32, #tpu.memory_space<vmem>>, vector<1x32xf32>
    %cst_36 = arith.constant dense<0.000000e+00> : vector<24xf32>
    %91 = vector.multi_reduction <add>, %88, %cst_36 [1] : vector<24x32xf32> to vector<24xf32>
    %92 = vector.shape_cast %91 : vector<24xf32> to vector<24x1xf32>
    %cst_37 = arith.constant 3.200000e+01 : f32
    %93 = vector.broadcast %cst_37 : f32 to vector<24x1xf32>
    %94 = arith.divf %92, %93 : vector<24x1xf32>
    %95 = vector.broadcast %94 : vector<24x1xf32> to vector<24x32xf32>
    %96 = arith.subf %88, %95 : vector<24x32xf32>
    %97 = arith.mulf %96, %96 : vector<24x32xf32>
    %cst_38 = arith.constant dense<0.000000e+00> : vector<24xf32>
    %98 = vector.multi_reduction <add>, %97, %cst_38 [1] : vector<24x32xf32> to vector<24xf32>
    %99 = vector.shape_cast %98 : vector<24xf32> to vector<24x1xf32>
    %cst_39 = arith.constant 3.200000e+01 : f32
    %100 = vector.broadcast %cst_39 : f32 to vector<24x1xf32>
    %101 = arith.divf %99, %100 : vector<24x1xf32>
    %cst_40 = arith.constant 9.99999997E-7 : f32
    %102 = vector.broadcast %cst_40 : f32 to vector<24x1xf32>
    %103 = arith.addf %101, %102 : vector<24x1xf32>
    %104 = math.rsqrt %103 : vector<24x1xf32>
    %105 = vector.broadcast %104 : vector<24x1xf32> to vector<24x32xf32>
    %106 = arith.mulf %96, %105 : vector<24x32xf32>
    %107 = vector.broadcast %89 : vector<1x32xf32> to vector<24x32xf32>
    %108 = arith.mulf %106, %107 : vector<24x32xf32>
    %109 = vector.broadcast %90 : vector<1x32xf32> to vector<24x32xf32>
    %110 = arith.addf %108, %109 : vector<24x32xf32>
    %c0_41 = arith.constant 0 : index
    %c0_42 = arith.constant 0 : index
    %111 = vector.load %arg10[%c0_41, %c0_42] : memref<32x128xf32, #tpu.memory_space<vmem>>, vector<32x128xf32>
    %112 = arith.truncf %110 : vector<24x32xf32> to vector<24x32xbf16>
    %113 = arith.truncf %111 : vector<32x128xf32> to vector<32x128xbf16>
    %cst_43 = arith.constant dense<0.000000e+00> : vector<24x128xf32>
    %114 = tpu.matmul %112, %113, %cst_43 {dimension_numbers = #tpu.dot_dimension_numbers<[1], [0], [0], [1], [0, 0, 1, 1], [], []>} : vector<24x32xbf16>, vector<32x128xbf16>, vector<24x128xf32> -> vector<24x128xf32>
    %c0_44 = arith.constant 0 : index
    %c0_45 = arith.constant 0 : index
    %115 = vector.load %arg11[%c0_44, %c0_45] : memref<1x128xf32, #tpu.memory_space<vmem>>, vector<1x128xf32>
    %116 = vector.broadcast %115 : vector<1x128xf32> to vector<24x128xf32>
    %117 = arith.addf %114, %116 : vector<24x128xf32>
    %cst_46 = arith.constant 5.000000e-01 : f32
    %118 = vector.broadcast %cst_46 : f32 to vector<24x128xf32>
    %119 = arith.mulf %118, %117 : vector<24x128xf32>
    %cst_47 = arith.constant 0.707106769 : f32
    %120 = vector.broadcast %cst_47 : f32 to vector<24x128xf32>
    %121 = arith.mulf %117, %120 : vector<24x128xf32>
    %122 = math.erf %121 : vector<24x128xf32>
    %cst_48 = arith.constant 1.000000e+00 : f32
    %123 = vector.broadcast %cst_48 : f32 to vector<24x128xf32>
    %124 = arith.addf %123, %122 : vector<24x128xf32>
    %125 = arith.mulf %119, %124 : vector<24x128xf32>
    %c0_49 = arith.constant 0 : index
    %c0_50 = arith.constant 0 : index
    %126 = vector.load %arg12[%c0_49, %c0_50] : memref<128x32xf32, #tpu.memory_space<vmem>>, vector<128x32xf32>
    %127 = arith.truncf %125 : vector<24x128xf32> to vector<24x128xbf16>
    %128 = arith.truncf %126 : vector<128x32xf32> to vector<128x32xbf16>
    %cst_51 = arith.constant dense<0.000000e+00> : vector<24x32xf32>
    %129 = tpu.matmul %127, %128, %cst_51 {dimension_numbers = #tpu.dot_dimension_numbers<[1], [0], [0], [1], [0, 0, 1, 1], [], []>} : vector<24x128xbf16>, vector<128x32xbf16>, vector<24x32xf32> -> vector<24x32xf32>
    %130 = arith.addf %88, %129 : vector<24x32xf32>
    %c0_52 = arith.constant 0 : index
    %c0_53 = arith.constant 0 : index
    %131 = vector.load %arg13[%c0_52, %c0_53] : memref<1x32xf32, #tpu.memory_space<vmem>>, vector<1x32xf32>
    %132 = vector.broadcast %131 : vector<1x32xf32> to vector<24x32xf32>
    %133 = arith.addf %130, %132 : vector<24x32xf32>
    %c0_54 = arith.constant 0 : index
    %c0_55 = arith.constant 0 : index
    %c0_56 = arith.constant 0 : index
    %134 = vector.load %arg14[%c0_54, %c0_55, %c0_56] : memref<1x24x32xf32, #tpu.memory_space<vmem>>, vector<1x24x32xf32>
    %135 = vector.shape_cast %134 : vector<1x24x32xf32> to vector<24x32xf32>
    %136 = vector.shape_cast %133 : vector<24x32xf32> to vector<1x24x32xf32>
    tpu.vector_store %arg14[%c0_54, %c0_55, %c0_56], %136 {strides = array<i32>} : memref<1x24x32xf32, #tpu.memory_space<vmem>>, vector<1x24x32xf32>,
    return
  }
  func.func @transform_0(%arg0: i32) -> (i32, i32, i32) {
    %c0_i32 = arith.constant 0 : i32
    %c0_i32_0 = arith.constant 0 : i32
    %c0_i32_1 = arith.constant 0 : i32
    return %arg0, %c0_i32, %c0_i32_0 : i32, i32, i32
  }
  func.func @transform_1(%arg0: i32) -> (i32, i32) {
    %c0_i32 = arith.constant 0 : i32
    %c0_i32_0 = arith.constant 0 : i32
    %c0_i32_1 = arith.constant 0 : i32
    return %c0_i32, %c0_i32_0 : i32, i32
  }
  func.func @transform_2(%arg0: i32) -> (i32, i32) {
    %c0_i32 = arith.constant 0 : i32
    %c0_i32_0 = arith.constant 0 : i32
    %c0_i32_1 = arith.constant 0 : i32
    return %c0_i32, %c0_i32_0 : i32, i32
  }
  func.func @transform_3(%arg0: i32) -> (i32, i32) {
    %c0_i32 = arith.constant 0 : i32
    %c0_i32_0 = arith.constant 0 : i32
    %c0_i32_1 = arith.constant 0 : i32
    return %c0_i32, %c0_i32_0 : i32, i32
  }
  func.func @transform_4(%arg0: i32) -> (i32, i32) {
    %c0_i32 = arith.constant 0 : i32
    %c0_i32_0 = arith.constant 0 : i32
    %c0_i32_1 = arith.constant 0 : i32
    return %c0_i32, %c0_i32_0 : i32, i32
  }
  func.func @transform_5(%arg0: i32) -> (i32, i32) {
    %c0_i32 = arith.constant 0 : i32
    %c0_i32_0 = arith.constant 0 : i32
    %c0_i32_1 = arith.constant 0 : i32
    return %c0_i32, %c0_i32_0 : i32, i32
  }
  func.func @transform_6(%arg0: i32) -> (i32, i32) {
    %c0_i32 = arith.constant 0 : i32
    %c0_i32_0 = arith.constant 0 : i32
    %c0_i32_1 = arith.constant 0 : i32
    return %c0_i32, %c0_i32_0 : i32, i32
  }
  func.func @transform_7(%arg0: i32) -> (i32, i32) {
    %c0_i32 = arith.constant 0 : i32
    %c0_i32_0 = arith.constant 0 : i32
    %c0_i32_1 = arith.constant 0 : i32
    return %c0_i32, %c0_i32_0 : i32, i32
  }
  func.func @transform_8(%arg0: i32) -> (i32, i32) {
    %c0_i32 = arith.constant 0 : i32
    %c0_i32_0 = arith.constant 0 : i32
    %c0_i32_1 = arith.constant 0 : i32
    return %c0_i32, %c0_i32_0 : i32, i32
  }
  func.func @transform_9(%arg0: i32) -> (i32, i32) {
    %c0_i32 = arith.constant 0 : i32
    %c0_i32_0 = arith.constant 0 : i32
    %c0_i32_1 = arith.constant 0 : i32
    return %c0_i32, %c0_i32_0 : i32, i32
  }
  func.func @transform_10(%arg0: i32) -> (i32, i32) {
    %c0_i32 = arith.constant 0 : i32
    %c0_i32_0 = arith.constant 0 : i32
    %c0_i32_1 = arith.constant 0 : i32
    return %c0_i32, %c0_i32_0 : i32, i32
  }
  func.func @transform_11(%arg0: i32) -> (i32, i32) {
    %c0_i32 = arith.constant 0 : i32
    %c0_i32_0 = arith.constant 0 : i32
    %c0_i32_1 = arith.constant 0 : i32
    return %c0_i32, %c0_i32_0 : i32, i32
  }
  func.func @transform_12(%arg0: i32) -> (i32, i32) {
    %c0_i32 = arith.constant 0 : i32
    %c0_i32_0 = arith.constant 0 : i32
    %c0_i32_1 = arith.constant 0 : i32
    return %c0_i32, %c0_i32_0 : i32, i32
  }
  func.func @transform_13(%arg0: i32) -> (i32, i32, i32) {
    %c0_i32 = arith.constant 0 : i32
    %c0_i32_0 = arith.constant 0 : i32
    %c0_i32_1 = arith.constant 0 : i32
    return %arg0, %c0_i32, %c0_i32_0 : i32, i32, i32
  }
}

module attributes {stable_mosaic.version = 11 : i64} {
  func.func @_head_kernel(%arg0: i32, %arg1: memref<4x32xf32, #tpu.memory_space<vmem>>, %arg2: memref<1x32xf32, #tpu.memory_space<vmem>>, %arg3: memref<1x32xf32, #tpu.memory_space<vmem>>, %arg4: memref<32x32xf32, #tpu.memory_space<vmem>>, %arg5: memref<1x32xf32, #tpu.memory_space<vmem>>, %arg6: memref<32x8xf32, #tpu.memory_space<vmem>>, %arg7: memref<1x8xf32, #tpu.memory_space<vmem>>, %arg8: memref<4x8xf32, #tpu.memory_space<vmem>>) attributes {dimension_semantics = [#tpu.dimension_semantics<arbitrary>], iteration_bounds = array<i64: 1>, scalar_prefetch = 0 : i64, scratch_operands = 0 : i64, tpu.core_type = #tpu.core_type<tc>, window_params = [{pipeline_mode = #tpu.pipeline_mode<synchronous>, transform_indices = @transform_0, window_bounds = array<i64: 4, 32>}, {pipeline_mode = #tpu.pipeline_mode<synchronous>, transform_indices = @transform_1, window_bounds = array<i64: 1, 32>}, {pipeline_mode = #tpu.pipeline_mode<synchronous>, transform_indices = @transform_2, window_bounds = array<i64: 1, 32>}, {pipeline_mode = #tpu.pipeline_mode<synchronous>, transform_indices = @transform_3, window_bounds = array<i64: 32, 32>}, {pipeline_mode = #tpu.pipeline_mode<synchronous>, transform_indices = @transform_4, window_bounds = array<i64: 1, 32>}, {pipeline_mode = #tpu.pipeline_mode<synchronous>, transform_indices = @transform_5, window_bounds = array<i64: 32, 8>}, {pipeline_mode = #tpu.pipeline_mode<synchronous>, transform_indices = @transform_6, window_bounds = array<i64: 1, 8>}, {pipeline_mode = #tpu.pipeline_mode<synchronous>, transform_indices = @transform_7, window_bounds = array<i64: 4, 8>}]} {
    %c0 = arith.constant 0 : index
    %c0_0 = arith.constant 0 : index
    %0 = vector.load %arg1[%c0, %c0_0] : memref<4x32xf32, #tpu.memory_space<vmem>>, vector<4x32xf32>
    %c0_1 = arith.constant 0 : index
    %c0_2 = arith.constant 0 : index
    %1 = vector.load %arg2[%c0_1, %c0_2] : memref<1x32xf32, #tpu.memory_space<vmem>>, vector<1x32xf32>
    %c0_3 = arith.constant 0 : index
    %c0_4 = arith.constant 0 : index
    %2 = vector.load %arg3[%c0_3, %c0_4] : memref<1x32xf32, #tpu.memory_space<vmem>>, vector<1x32xf32>
    %cst = arith.constant dense<0.000000e+00> : vector<4xf32>
    %3 = vector.multi_reduction <add>, %0, %cst [1] : vector<4x32xf32> to vector<4xf32>
    %4 = vector.shape_cast %3 : vector<4xf32> to vector<4x1xf32>
    %cst_5 = arith.constant 3.200000e+01 : f32
    %5 = vector.broadcast %cst_5 : f32 to vector<4x1xf32>
    %6 = arith.divf %4, %5 : vector<4x1xf32>
    %7 = vector.broadcast %6 : vector<4x1xf32> to vector<4x32xf32>
    %8 = arith.subf %0, %7 : vector<4x32xf32>
    %9 = arith.mulf %8, %8 : vector<4x32xf32>
    %cst_6 = arith.constant dense<0.000000e+00> : vector<4xf32>
    %10 = vector.multi_reduction <add>, %9, %cst_6 [1] : vector<4x32xf32> to vector<4xf32>
    %11 = vector.shape_cast %10 : vector<4xf32> to vector<4x1xf32>
    %cst_7 = arith.constant 3.200000e+01 : f32
    %12 = vector.broadcast %cst_7 : f32 to vector<4x1xf32>
    %13 = arith.divf %11, %12 : vector<4x1xf32>
    %cst_8 = arith.constant 9.99999997E-7 : f32
    %14 = vector.broadcast %cst_8 : f32 to vector<4x1xf32>
    %15 = arith.addf %13, %14 : vector<4x1xf32>
    %16 = math.rsqrt %15 : vector<4x1xf32>
    %17 = vector.broadcast %16 : vector<4x1xf32> to vector<4x32xf32>
    %18 = arith.mulf %8, %17 : vector<4x32xf32>
    %19 = vector.broadcast %1 : vector<1x32xf32> to vector<4x32xf32>
    %20 = arith.mulf %18, %19 : vector<4x32xf32>
    %21 = vector.broadcast %2 : vector<1x32xf32> to vector<4x32xf32>
    %22 = arith.addf %20, %21 : vector<4x32xf32>
    %c0_9 = arith.constant 0 : index
    %c0_10 = arith.constant 0 : index
    %23 = vector.load %arg4[%c0_9, %c0_10] : memref<32x32xf32, #tpu.memory_space<vmem>>, vector<32x32xf32>
    %24 = arith.truncf %22 : vector<4x32xf32> to vector<4x32xbf16>
    %25 = arith.truncf %23 : vector<32x32xf32> to vector<32x32xbf16>
    %cst_11 = arith.constant dense<0.000000e+00> : vector<4x32xf32>
    %26 = tpu.matmul %24, %25, %cst_11 {dimension_numbers = #tpu.dot_dimension_numbers<[1], [0], [0], [1], [0, 0, 1, 1], [], []>} : vector<4x32xbf16>, vector<32x32xbf16>, vector<4x32xf32> -> vector<4x32xf32>
    %c0_12 = arith.constant 0 : index
    %c0_13 = arith.constant 0 : index
    %27 = vector.load %arg5[%c0_12, %c0_13] : memref<1x32xf32, #tpu.memory_space<vmem>>, vector<1x32xf32>
    %28 = vector.broadcast %27 : vector<1x32xf32> to vector<4x32xf32>
    %29 = arith.addf %26, %28 : vector<4x32xf32>
    %cst_14 = arith.constant 5.000000e-01 : f32
    %30 = vector.broadcast %cst_14 : f32 to vector<4x32xf32>
    %31 = arith.mulf %30, %29 : vector<4x32xf32>
    %cst_15 = arith.constant 0.707106769 : f32
    %32 = vector.broadcast %cst_15 : f32 to vector<4x32xf32>
    %33 = arith.mulf %29, %32 : vector<4x32xf32>
    %34 = math.erf %33 : vector<4x32xf32>
    %cst_16 = arith.constant 1.000000e+00 : f32
    %35 = vector.broadcast %cst_16 : f32 to vector<4x32xf32>
    %36 = arith.addf %35, %34 : vector<4x32xf32>
    %37 = arith.mulf %31, %36 : vector<4x32xf32>
    %c0_17 = arith.constant 0 : index
    %c0_18 = arith.constant 0 : index
    %38 = vector.load %arg6[%c0_17, %c0_18] : memref<32x8xf32, #tpu.memory_space<vmem>>, vector<32x8xf32>
    %39 = arith.truncf %37 : vector<4x32xf32> to vector<4x32xbf16>
    %40 = arith.truncf %38 : vector<32x8xf32> to vector<32x8xbf16>
    %cst_19 = arith.constant dense<0.000000e+00> : vector<4x8xf32>
    %41 = tpu.matmul %39, %40, %cst_19 {dimension_numbers = #tpu.dot_dimension_numbers<[1], [0], [0], [1], [0, 0, 1, 1], [], []>} : vector<4x32xbf16>, vector<32x8xbf16>, vector<4x8xf32> -> vector<4x8xf32>
    %c0_20 = arith.constant 0 : index
    %c0_21 = arith.constant 0 : index
    %42 = vector.load %arg7[%c0_20, %c0_21] : memref<1x8xf32, #tpu.memory_space<vmem>>, vector<1x8xf32>
    %43 = vector.broadcast %42 : vector<1x8xf32> to vector<4x8xf32>
    %44 = arith.addf %41, %43 : vector<4x8xf32>
    %c0_22 = arith.constant 0 : index
    %c0_23 = arith.constant 0 : index
    %45 = vector.load %arg8[%c0_22, %c0_23] : memref<4x8xf32, #tpu.memory_space<vmem>>, vector<4x8xf32>
    tpu.vector_store %arg8[%c0_22, %c0_23], %44 {strides = array<i32>} : memref<4x8xf32, #tpu.memory_space<vmem>>, vector<4x8xf32>,
    return
  }
  func.func @transform_0(%arg0: i32) -> (i32, i32) {
    %c0_i32 = arith.constant 0 : i32
    %c0_i32_0 = arith.constant 0 : i32
    %c0_i32_1 = arith.constant 0 : i32
    return %c0_i32, %c0_i32_0 : i32, i32
  }
  func.func @transform_1(%arg0: i32) -> (i32, i32) {
    %c0_i32 = arith.constant 0 : i32
    %c0_i32_0 = arith.constant 0 : i32
    %c0_i32_1 = arith.constant 0 : i32
    return %c0_i32, %c0_i32_0 : i32, i32
  }
  func.func @transform_2(%arg0: i32) -> (i32, i32) {
    %c0_i32 = arith.constant 0 : i32
    %c0_i32_0 = arith.constant 0 : i32
    %c0_i32_1 = arith.constant 0 : i32
    return %c0_i32, %c0_i32_0 : i32, i32
  }
  func.func @transform_3(%arg0: i32) -> (i32, i32) {
    %c0_i32 = arith.constant 0 : i32
    %c0_i32_0 = arith.constant 0 : i32
    %c0_i32_1 = arith.constant 0 : i32
    return %c0_i32, %c0_i32_0 : i32, i32
  }
  func.func @transform_4(%arg0: i32) -> (i32, i32) {
    %c0_i32 = arith.constant 0 : i32
    %c0_i32_0 = arith.constant 0 : i32
    %c0_i32_1 = arith.constant 0 : i32
    return %c0_i32, %c0_i32_0 : i32, i32
  }
  func.func @transform_5(%arg0: i32) -> (i32, i32) {
    %c0_i32 = arith.constant 0 : i32
    %c0_i32_0 = arith.constant 0 : i32
    %c0_i32_1 = arith.constant 0 : i32
    return %c0_i32, %c0_i32_0 : i32, i32
  }
  func.func @transform_6(%arg0: i32) -> (i32, i32) {
    %c0_i32 = arith.constant 0 : i32
    %c0_i32_0 = arith.constant 0 : i32
    %c0_i32_1 = arith.constant 0 : i32
    return %c0_i32, %c0_i32_0 : i32, i32
  }
  func.func @transform_7(%arg0: i32) -> (i32, i32) {
    %c0_i32 = arith.constant 0 : i32
    %c0_i32_0 = arith.constant 0 : i32
    %c0_i32_1 = arith.constant 0 : i32
    return %c0_i32, %c0_i32_0 : i32, i32
  }
}

</mosaic_0001>

<llo_original>
// kernel: det_model_forward.4
$region0: #{det_model_forward.4}
  #allocation0 [shape = 'u32[]', space=smem, size = 0x4, offset = 0x4, fixed_abs, tag = 'smem constant byte address 0x4 - core index']
  #allocation1 [shape = 'u32[144,128]{1,0:T(1,128)}', space=vmem, size = 0x12000, scoped, tag = 'internal scratch']
  %s0 = inlined_call_operand.vmem [shape: f32[64,32], index: 0, kind: input, shape index: {}]
  %s1 = inlined_call_operand.vmem [shape: f32[32,32], index: 1, kind: input, shape index: {}]
  %s2 = inlined_call_operand.vmem [shape: f32[1,32], index: 2, kind: input, shape index: {}]
  %s3 = inlined_call_operand.vmem [shape: f32[64,32], index: 3, kind: output, shape index: {}]
  %s4 = sld [smem:[#allocation0]]
  $region22: #{det_model_forward.4} parent=0
    _
  %s6 = ssub.s32 1, %s4
  %s7 = scalar_select 0, %s6, %s4
  // Predicated region
  $region2: #{det_model_forward.4} parent=0 // pred_check
    _
  $region3: #{det_model_forward.4} parent=0 // pred_check_branch
    %9 = sbr.rel (0) target = $region5
  $region4: #{det_model_forward.4} parent=0 // pred_region
    _
  $region5: #{det_model_forward.4} parent=0 // pred_fallthru
    _
  // Predicated region
  $region6: #{det_model_forward.4} parent=0 // pred_check
    _
  $region7: #{det_model_forward.4} parent=0 // pred_check_branch
    %11 = sbr.rel (0) target = $region9
  $region8: #{det_model_forward.4} parent=0 // pred_region
    _
  $region9: #{det_model_forward.4} parent=0 // pred_fallthru
    _
  // Predicated region
  $region10: #{det_model_forward.4} parent=0 // pred_check
    _
  $region11: #{det_model_forward.4} parent=0 // pred_check_branch
    %13 = sbr.rel (0) target = $region13
  $region12: #{det_model_forward.4} parent=0 // pred_region
    _
  $region13: #{det_model_forward.4} parent=0 // pred_fallthru
    _
  %v15 = vld [vmem:[%s0] sm:$0xff]
  %v16 = vld [vmem:[%s0 + $0x8] sm:$0xff]
  %v17 = vld [vmem:[%s0 + $0x10] sm:$0xff]
  %v18 = vld [vmem:[%s0 + $0x18] sm:$0xff]
  %v19 = vld [vmem:[%s0 + $0x20] sm:$0xff]
  %v20 = vld [vmem:[%s0 + $0x28] sm:$0xff]
  %v21 = vld [vmem:[%s0 + $0x30] sm:$0xff]
  %v22 = vld [vmem:[%s0 + $0x38] sm:$0xff]
  %v23 = vld [vmem:[%s1] sm:$0xff]
  %v24 = vld [vmem:[%s1 + $0x8] sm:$0xff]
  %v25 = vld [vmem:[%s1 + $0x10] sm:$0xff]
  %v26 = vld [vmem:[%s1 + $0x18] sm:$0xff]
  %v27 = vpack.c.bf16 %v16, %v15
  %v28 = vpack.c.bf16 %v18, %v17
  %v29 = vpack.c.bf16 %v20, %v19
  %v30 = vpack.c.bf16 %v22, %v21
  %v31 = vpack.c.bf16 %v24, %v23
  %v32 = vpack.c.bf16 %v26, %v25
  %v33 = vld [vmem:[%s2] sm:$0x1]
  %v35 = vlaneseq
  %v36 = vshrl.u32 %v35, 7
  %v37 = vsub.s32 0, %v36
  %v38 = vrot.slane %v33, %v37
  %vm40 = vcmask 261120
  %v42 = vsel %vm40, %v27, 0
  %v45 = vsel %vm40, %v28, 0
  %v48 = vsel %vm40, %v29, 0
  %v51 = vsel %vm40, %v30, 0
  %53 = vmatprep.subr.bf16.mxu0 0
  %54 = vmatpush1.bf16.msra.mxu0 %v31
  %55 = vmatprep.subr.bf16.mxu0 0
  %56 = vmatpush1.bf16.msra.mxu0 %v32
  %57 = vmatprep.subr.bf16.mxu0 0
  %58 = vmatpush1.bf16.msra.mxu0 0
  %59 = vmatprep.subr.bf16.mxu0 0
  %60 = vmatpush1.bf16.msra.mxu0 0
  %61 = vmatprep.subr.bf16.mxu0 0
  %62 = vmatpush1.bf16.msra.mxu0 0
  %63 = vmatprep.subr.bf16.mxu0 0
  %64 = vmatpush1.bf16.msra.mxu0 0
  %65 = vmatprep.subr.bf16.mxu0 0
  %66 = vmatpush1.bf16.msra.mxu0 0
  %67 = vmatprep.subr.bf16.mxu0 0
  %68 = vmatpush1.bf16.msra.mxu0 0
  %69 = vmatprep.subr.bf16.mxu0 0
  %70 = vmatpush1.bf16.msra.mxu0 0
  %71 = vmatprep.subr.bf16.mxu0 0
  %72 = vmatpush1.bf16.msra.mxu0 0
  %73 = vmatprep.subr.bf16.mxu0 0
  %74 = vmatpush1.bf16.msra.mxu0 0
  %75 = vmatprep.subr.bf16.mxu0 0
  %76 = vmatpush1.bf16.msra.mxu0 0
  %77 = vmatprep.subr.bf16.mxu0 0
  %78 = vmatpush1.bf16.msra.mxu0 0
  %79 = vmatprep.subr.bf16.mxu0 0
  %80 = vmatpush1.bf16.msra.mxu0 0
  %81 = vmatprep.subr.bf16.mxu0 0
  %82 = vmatpush1.bf16.msra.mxu0 0
  %83 = vmatprep.subr.bf16.mxu0 0
  %84 = vmatpush1.bf16.msra.mxu0 0
  %85 = vmatprep.mubr.bf16.mxu0 0
  %86 = vmatmul.mubr.bf16.gmra.mrb[0].mxu0 %v42
  %v87 = vpop.f32.mrb[0].mxu0
  %v88 = vadd.f32 %v38, %v87
  %v89 = vpop.f32.mrb[0].mxu0
  %v90 = vpop.f32.mrb[0].mxu0
  %v91 = vadd.f32 %v38, %v90
  %v92 = vpop.f32.mrb[0].mxu0
  %93 = vmatprep.mubr.bf16.mxu0 0
  %94 = vmatmul.mubr.bf16.gmra.mrb[0].mxu0 %v45
  %v95 = vpop.f32.mrb[0].mxu0
  %v96 = vadd.f32 %v38, %v95
  %v97 = vpop.f32.mrb[0].mxu0
  %v98 = vpop.f32.mrb[0].mxu0
  %v99 = vadd.f32 %v38, %v98
  %v100 = vpop.f32.mrb[0].mxu0
  %101 = vmatprep.mubr.bf16.mxu0 0
  %102 = vmatmul.mubr.bf16.gmra.mrb[0].mxu0 %v48
  %v103 = vpop.f32.mrb[0].mxu0
  %v104 = vadd.f32 %v38, %v103
  %v105 = vpop.f32.mrb[0].mxu0
  %v106 = vpop.f32.mrb[0].mxu0
  %v107 = vadd.f32 %v38, %v106
  %v108 = vpop.f32.mrb[0].mxu0
  %109 = vmatprep.mubr.bf16.mxu0 0
  %110 = vmatmul.mubr.bf16.gmra.mrb[0].mxu0 %v51
  %v111 = vpop.f32.mrb[0].mxu0
  %v112 = vadd.f32 %v38, %v111
  %v113 = vpop.f32.mrb[0].mxu0
  %v114 = vpop.f32.mrb[0].mxu0
  %v115 = vadd.f32 %v38, %v114
  %v116 = vpop.f32.mrb[0].mxu0
  %117 = vdwg.mxu0
  %118 = vst.msk [vmem:[%s3] sm:$0xff] %vm40, %v88
  %119 = vst.msk [vmem:[%s3 + $0x8] sm:$0xff] %vm40, %v91
  %120 = vst.msk [vmem:[%s3 + $0x10] sm:$0xff] %vm40, %v96
  %121 = vst.msk [vmem:[%s3 + $0x18] sm:$0xff] %vm40, %v99
  %122 = vst.msk [vmem:[%s3 + $0x20] sm:$0xff] %vm40, %v104
  %123 = vst.msk [vmem:[%s3 + $0x28] sm:$0xff] %vm40, %v107
  %124 = vst.msk [vmem:[%s3 + $0x30] sm:$0xff] %vm40, %v112
  %125 = vst.msk [vmem:[%s3 + $0x38] sm:$0xff] %vm40, %v115
  // Predicated region
  $region14: #{det_model_forward.4} parent=0 // pred_check
    _
  $region15: #{det_model_forward.4} parent=0 // pred_check_branch
    %127 = sbr.rel (0) target = $region17
  $region16: #{det_model_forward.4} parent=0 // pred_region
    _
  $region17: #{det_model_forward.4} parent=0 // pred_fallthru
    _
  // Predicated region
  $region18: #{det_model_forward.4} parent=0 // pred_check
    _
  $region19: #{det_model_forward.4} parent=0 // pred_check_branch
    %129 = sbr.rel (0) target = $region21
  $region20: #{det_model_forward.4} parent=0 // pred_region
    _
  $region21: #{det_model_forward.4} parent=0 // pred_fallthru
    _

// kernel: det_model_forward.5
$region0: #{det_model_forward.5}
  #allocation0 [shape = 'u32[]', space=smem, size = 0x4, offset = 0x4, fixed_abs, tag = 'smem constant byte address 0x4 - core index']
  #allocation1 [shape = 'u32[144,128]{1,0:T(1,128)}', space=vmem, size = 0x12000, scoped, tag = 'internal scratch']
  %s0 = inlined_call_operand.vmem [shape: f32[4,24,32], index: 0, kind: input, shape index: {}]
  %s1 = inlined_call_operand.vmem [shape: f32[1,32], index: 1, kind: input, shape index: {}]
  %s2 = inlined_call_operand.vmem [shape: f32[1,32], index: 2, kind: input, shape index: {}]
  %s3 = inlined_call_operand.vmem [shape: f32[32,96], index: 3, kind: input, shape index: {}]
  %s4 = inlined_call_operand.vmem [shape: f32[1,96], index: 4, kind: input, shape index: {}]
  %s5 = inlined_call_operand.vmem [shape: f32[32,32], index: 5, kind: input, shape index: {}]
  %s6 = inlined_call_operand.vmem [shape: f32[1,32], index: 6, kind: input, shape index: {}]
  %s7 = inlined_call_operand.vmem [shape: f32[1,32], index: 7, kind: input, shape index: {}]
  %s8 = inlined_call_operand.vmem [shape: f32[1,32], index: 8, kind: input, shape index: {}]
  %s9 = inlined_call_operand.vmem [shape: f32[32,128], index: 9, kind: input, shape index: {}]
  %s10 = inlined_call_operand.vmem [shape: f32[1,128], index: 10, kind: input, shape index: {}]
  %s11 = inlined_call_operand.vmem [shape: f32[128,32], index: 11, kind: input, shape index: {}]
  %s12 = inlined_call_operand.vmem [shape: f32[1,32], index: 12, kind: input, shape index: {}]
  %s13 = inlined_call_operand.vmem [shape: f32[4,24,32], index: 13, kind: output, shape index: {}]
  %s14 = sld [smem:[#allocation0]]
  $region85: #{det_model_forward.5} parent=0
    _
  %s16 = ssub.s32 1, %s14
  %s17 = scalar_select 0, %s16, %s14
  loop: start=0, step=1, limit=6
  $region2: #{det_model_forward.5} parent=0 // loop_pre_header
    _
  $region3: #{det_model_forward.5} parent=0 // loop_header
    %s19 = sphi 0, %s23
    %p20 = scmp.ge.s32.totalorder %s19, 6
    %s29 = sphi 0, %s31
    %s32 = sphi 0, %s29
    %s33 = sphi 0, %s32
    %s49 = sphi 0, %s33
    %s53 = sphi 0, %s53
    %s55 = sphi 0, %s53
    %s56 = sphi 0, %s55
    %s70 = sphi 0, %s56
    %s74 = sphi 0, %s74
    %s76 = sphi 0, %s74
    %s77 = sphi 0, %s76
    %s91 = sphi 0, %s77
    %s95 = sphi 0, %s95
    %s97 = sphi 0, %s95
    %s98 = sphi 0, %s97
    %s112 = sphi 0, %s98
    %s116 = sphi 0, %s116
    %s118 = sphi 0, %s116
    %s119 = sphi 0, %s118
    %s133 = sphi 0, %s119
    %s137 = sphi 0, %s137
    %s139 = sphi 0, %s137
    %s140 = sphi 0, %s139
    %s154 = sphi 0, %s140
    %s158 = sphi 0, %s158
    %s160 = sphi 0, %s158
    %s161 = sphi 0, %s160
    %s175 = sphi 0, %s161
    %s179 = sphi 0, %s179
    %s181 = sphi 0, %s179
    %s182 = sphi 0, %s181
    %s196 = sphi 0, %s182
    %s200 = sphi 0, %s200
    %s202 = sphi 0, %s200
    %s203 = sphi 0, %s202
    %s217 = sphi 0, %s203
    %s221 = sphi 0, %s221
    %s223 = sphi 0, %s221
    %s224 = sphi 0, %s223
    %s238 = sphi 0, %s224
    %s242 = sphi 0, %s242
    %s244 = sphi 0, %s242
    %s245 = sphi 0, %s244
    %s259 = sphi 0, %s245
    %s263 = sphi 0, %s263
    %s265 = sphi 0, %s263
    %s266 = sphi 0, %s265
    %s280 = sphi 0, %s266
    %s284 = sphi 0, %s284
    %s286 = sphi 0, %s284
    %s287 = sphi 0, %s286
    %s301 = sphi 0, %s287
    %s307 = sphi 0, %s309
    %s310 = sphi 0, %s307
    %s311 = sphi 0, %s310
    %s327 = sphi 0, %s311
  $region4: #{det_model_forward.5} parent=0 // loop_header_branch
    %22 = sbr.rel (%p20) target = $region8
  $region5: #{det_model_forward.5} parent=0 // loop_body
    %s24 = ssub.s32 %s19, 1
    %s25 = ssub.s32 %s19, 2
    %s26 = sadd.s32 %s19, 1
    %s27 = ssub.s32 %s19, %s26
    %p28 = scmp.eq.s32.totalorder %s27, 0
    %s30 = sadd.s32 %s29, 1
    %s31 = scalar_select %p28, %s29, %s30
    %p34 = pneg %p28
    %p35 = scmp.eq.s32.totalorder %s19, 3
    %p36 = por %p34, %p35
    %p37 = scmp.ne.s32.totalorder %s29, %s32
    %p38 = scmp.eq.s32.totalorder %s19, 0
    %p39 = por %p37, %p38
    %p40 = scmp.ne.s32.totalorder %s29, %s32
    %p41 = scmp.eq.s32.totalorder %s24, 3
    %p42 = por %p40, %p41
    %p43 = scmp.ne.s32.totalorder %s32, %s33
    %p44 = scmp.eq.s32.totalorder %s24, 0
    %p45 = por %p43, %p44
    %p46 = scmp.ne.s32.totalorder %s32, %s33
    %p47 = scmp.eq.s32.totalorder %s25, 3
    %p48 = por %p46, %p47
    %p50 = scmp.ne.s32.totalorder %s33, %s49
    %p51 = scmp.eq.s32.totalorder %s25, 0
    %p52 = por %p50, %p51
    %s54 = sadd.s32 %s53, 1
    %p57 = scmp.eq.s32.totalorder %s19, 3
    %p58 = scmp.ne.s32.totalorder %s53, %s55
    %p59 = scmp.eq.s32.totalorder %s19, 0
    %p60 = por %p58, %p59
    %p61 = scmp.ne.s32.totalorder %s53, %s55
    %p62 = scmp.eq.s32.totalorder %s24, 3
    %p63 = por %p61, %p62
    %p64 = scmp.ne.s32.totalorder %s55, %s56
    %p65 = scmp.eq.s32.totalorder %s24, 0
    %p66 = por %p64, %p65
    %p67 = scmp.ne.s32.totalorder %s55, %s56
    %p68 = scmp.eq.s32.totalorder %s25, 3
    %p69 = por %p67, %p68
    %p71 = scmp.ne.s32.totalorder %s56, %s70
    %p72 = scmp.eq.s32.totalorder %s25, 0
    %p73 = por %p71, %p72
    %s75 = sadd.s32 %s74, 1
    %p78 = scmp.eq.s32.totalorder %s19, 3
    %p79 = scmp.ne.s32.totalorder %s74, %s76
    %p80 = scmp.eq.s32.totalorder %s19, 0
    %p81 = por %p79, %p80
    %p82 = scmp.ne.s32.totalorder %s74, %s76
    %p83 = scmp.eq.s32.totalorder %s24, 3
    %p84 = por %p82, %p83
    %p85 = scmp.ne.s32.totalorder %s76, %s77
    %p86 = scmp.eq.s32.totalorder %s24, 0
    %p87 = por %p85, %p86
    %p88 = scmp.ne.s32.totalorder %s76, %s77
    %p89 = scmp.eq.s32.totalorder %s25, 3
    %p90 = por %p88, %p89
    %p92 = scmp.ne.s32.totalorder %s77, %s91
    %p93 = scmp.eq.s32.totalorder %s25, 0
    %p94 = por %p92, %p93
    %s96 = sadd.s32 %s95, 1
    %p99 = scmp.eq.s32.totalorder %s19, 3
    %p100 = scmp.ne.s32.totalorder %s95, %s97
    %p101 = scmp.eq.s32.totalorder %s19, 0
    %p102 = por %p100, %p101
    %p103 = scmp.ne.s32.totalorder %s95, %s97
    %p104 = scmp.eq.s32.totalorder %s24, 3
    %p105 = por %p103, %p104
    %p106 = scmp.ne.s32.totalorder %s97, %s98
    %p107 = scmp.eq.s32.totalorder %s24, 0
    %p108 = por %p106, %p107
    %p109 = scmp.ne.s32.totalorder %s97, %s98
    %p110 = scmp.eq.s32.totalorder %s25, 3
    %p111 = por %p109, %p110
    %p113 = scmp.ne.s32.totalorder %s98, %s112
    %p114 = scmp.eq.s32.totalorder %s25, 0
    %p115 = por %p113, %p114
    %s117 = sadd.s32 %s116, 1
    %p120 = scmp.eq.s32.totalorder %s19, 3
    %p121 = scmp.ne.s32.totalorder %s116, %s118
    %p122 = scmp.eq.s32.totalorder %s19, 0
    %p123 = por %p121, %p122
    %p124 = scmp.ne.s32.totalorder %s116, %s118
    %p125 = scmp.eq.s32.totalorder %s24, 3
    %p126 = por %p124, %p125
    %p127 = scmp.ne.s32.totalorder %s118, %s119
    %p128 = scmp.eq.s32.totalorder %s24, 0
    %p129 = por %p127, %p128
    %p130 = scmp.ne.s32.totalorder %s118, %s119
    %p131 = scmp.eq.s32.totalorder %s25, 3
    %p132 = por %p130, %p131
    %p134 = scmp.ne.s32.totalorder %s119, %s133
    %p135 = scmp.eq.s32.totalorder %s25, 0
    %p136 = por %p134, %p135
    %s138 = sadd.s32 %s137, 1
    %p141 = scmp.eq.s32.totalorder %s19, 3
    %p142 = scmp.ne.s32.totalorder %s137, %s139
    %p143 = scmp.eq.s32.totalorder %s19, 0
    %p144 = por %p142, %p143
    %p145 = scmp.ne.s32.totalorder %s137, %s139
    %p146 = scmp.eq.s32.totalorder %s24, 3
    %p147 = por %p145, %p146
    %p148 = scmp.ne.s32.totalorder %s139, %s140
    %p149 = scmp.eq.s32.totalorder %s24, 0
    %p150 = por %p148, %p149
    %p151 = scmp.ne.s32.totalorder %s139, %s140
    %p152 = scmp.eq.s32.totalorder %s25, 3
    %p153 = por %p151, %p152
    %p155 = scmp.ne.s32.totalorder %s140, %s154
    %p156 = scmp.eq.s32.totalorder %s25, 0
    %p157 = por %p155, %p156
    %s159 = sadd.s32 %s158, 1
    %p162 = scmp.eq.s32.totalorder %s19, 3
    %p163 = scmp.ne.s32.totalorder %s158, %s160
    %p164 = scmp.eq.s32.totalorder %s19, 0
    %p165 = por %p163, %p164
    %p166 = scmp.ne.s32.totalorder %s158, %s160
    %p167 = scmp.eq.s32.totalorder %s24, 3
    %p168 = por %p166, %p167
    %p169 = scmp.ne.s32.totalorder %s160, %s161
    %p170 = scmp.eq.s32.totalorder %s24, 0
    %p171 = por %p169, %p170
    %p172 = scmp.ne.s32.totalorder %s160, %s161
    %p173 = scmp.eq.s32.totalorder %s25, 3
    %p174 = por %p172, %p173
    %p176 = scmp.ne.s32.totalorder %s161, %s175
    %p177 = scmp.eq.s32.totalorder %s25, 0
    %p178 = por %p176, %p177
    %s180 = sadd.s32 %s179, 1
    %p183 = scmp.eq.s32.totalorder %s19, 3
    %p184 = scmp.ne.s32.totalorder %s179, %s181
    %p185 = scmp.eq.s32.totalorder %s19, 0
    %p186 = por %p184, %p185
    %p187 = scmp.ne.s32.totalorder %s179, %s181
    %p188 = scmp.eq.s32.totalorder %s24, 3
    %p189 = por %p187, %p188
    %p190 = scmp.ne.s32.totalorder %s181, %s182
    %p191 = scmp.eq.s32.totalorder %s24, 0
    %p192 = por %p190, %p191
    %p193 = scmp.ne.s32.totalorder %s181, %s182
    %p194 = scmp.eq.s32.totalorder %s25, 3
    %p195 = por %p193, %p194
    %p197 = scmp.ne.s32.totalorder %s182, %s196
    %p198 = scmp.eq.s32.totalorder %s25, 0
    %p199 = por %p197, %p198
    %s201 = sadd.s32 %s200, 1
    %p204 = scmp.eq.s32.totalorder %s19, 3
    %p205 = scmp.ne.s32.totalorder %s200, %s202
    %p206 = scmp.eq.s32.totalorder %s19, 0
    %p207 = por %p205, %p206
    %p208 = scmp.ne.s32.totalorder %s200, %s202
    %p209 = scmp.eq.s32.totalorder %s24, 3
    %p210 = por %p208, %p209
    %p211 = scmp.ne.s32.totalorder %s202, %s203
    %p212 = scmp.eq.s32.totalorder %s24, 0
    %p213 = por %p211, %p212
    %p214 = scmp.ne.s32.totalorder %s202, %s203
    %p215 = scmp.eq.s32.totalorder %s25, 3
    %p216 = por %p214, %p215
    %p218 = scmp.ne.s32.totalorder %s203, %s217
    %p219 = scmp.eq.s32.totalorder %s25, 0
    %p220 = por %p218, %p219
    %s222 = sadd.s32 %s221, 1
    %p225 = scmp.eq.s32.totalorder %s19, 3
    %p226 = scmp.ne.s32.totalorder %s221, %s223
    %p227 = scmp.eq.s32.totalorder %s19, 0
    %p228 = por %p226, %p227
    %p229 = scmp.ne.s32.totalorder %s221, %s223
    %p230 = scmp.eq.s32.totalorder %s24, 3
    %p231 = por %p229, %p230
    %p232 = scmp.ne.s32.totalorder %s223, %s224
    %p233 = scmp.eq.s32.totalorder %s24, 0
    %p234 = por %p232, %p233
    %p235 = scmp.ne.s32.totalorder %s223, %s224
    %p236 = scmp.eq.s32.totalorder %s25, 3
    %p237 = por %p235, %p236
    %p239 = scmp.ne.s32.totalorder %s224, %s238
    %p240 = scmp.eq.s32.totalorder %s25, 0
    %p241 = por %p239, %p240
    %s243 = sadd.s32 %s242, 1
    %p246 = scmp.eq.s32.totalorder %s19, 3
    %p247 = scmp.ne.s32.totalorder %s242, %s244
    %p248 = scmp.eq.s32.totalorder %s19, 0
    %p249 = por %p247, %p248
    %p250 = scmp.ne.s32.totalorder %s242, %s244
    %p251 = scmp.eq.s32.totalorder %s24, 3
    %p252 = por %p250, %p251
    %p253 = scmp.ne.s32.totalorder %s244, %s245
    %p254 = scmp.eq.s32.totalorder %s24, 0
    %p255 = por %p253, %p254
    %p256 = scmp.ne.s32.totalorder %s244, %s245
    %p257 = scmp.eq.s32.totalorder %s25, 3
    %p258 = por %p256, %p257
    %p260 = scmp.ne.s32.totalorder %s245, %s259
    %p261 = scmp.eq.s32.totalorder %s25, 0
    %p262 = por %p260, %p261
    %s264 = sadd.s32 %s263, 1
    %p267 = scmp.eq.s32.totalorder %s19, 3
    %p268 = scmp.ne.s32.totalorder %s263, %s265
    %p269 = scmp.eq.s32.totalorder %s19, 0
    %p270 = por %p268, %p269
    %p271 = scmp.ne.s32.totalorder %s263, %s265
    %p272 = scmp.eq.s32.totalorder %s24, 3
    %p273 = por %p271, %p272
    %p274 = scmp.ne.s32.totalorder %s265, %s266
    %p275 = scmp.eq.s32.totalorder %s24, 0
    %p276 = por %p274, %p275
    %p277 = scmp.ne.s32.totalorder %s265, %s266
    %p278 = scmp.eq.s32.totalorder %s25, 3
    %p279 = por %p277, %p278
    %p281 = scmp.ne.s32.totalorder %s266, %s280
    %p282 = scmp.eq.s32.totalorder %s25, 0
    %p283 = por %p281, %p282
    %s285 = sadd.s32 %s284, 1
    %p288 = scmp.eq.s32.totalorder %s19, 3
    %p289 = scmp.ne.s32.totalorder %s284, %s286
    %p290 = scmp.eq.s32.totalorder %s19, 0
    %p291 = por %p289, %p290
    %p292 = scmp.ne.s32.totalorder %s284, %s286
    %p293 = scmp.eq.s32.totalorder %s24, 3
    %p294 = por %p292, %p293
    %p295 = scmp.ne.s32.totalorder %s286, %s287
    %p296 = scmp.eq.s32.totalorder %s24, 0
    %p297 = por %p295, %p296
    %p298 = scmp.ne.s32.totalorder %s286, %s287
    %p299 = scmp.eq.s32.totalorder %s25, 3
    %p300 = por %p298, %p299
    %p302 = scmp.ne.s32.totalorder %s287, %s301
    %p303 = scmp.eq.s32.totalorder %s25, 0
    %p304 = por %p302, %p303
    %s305 = ssub.s32 %s19, %s26
    %p306 = scmp.eq.s32.totalorder %s305, 0
    %s308 = sadd.s32 %s307, 1
    %s309 = scalar_select %p306, %s307, %s308
    %p312 = pneg %p306
    %p313 = scmp.eq.s32.totalorder %s19, 3
    %p314 = por %p312, %p313
    %p315 = scmp.ne.s32.totalorder %s307, %s310
    %p316 = scmp.eq.s32.totalorder %s19, 0
    %p317 = por %p315, %p316
    %p318 = scmp.ne.s32.totalorder %s307, %s310
    %p319 = scmp.eq.s32.totalorder %s24, 3
    %p320 = por %p318, %p319
    %p321 = scmp.ne.s32.totalorder %s310, %s311
    %p322 = scmp.eq.s32.totalorder %s24, 0
    %p323 = por %p321, %p322
    %p324 = scmp.ne.s32.totalorder %s310, %s311
    %p325 = scmp.eq.s32.totalorder %s25, 3
    %p326 = por %p324, %p325
    %p328 = scmp.ne.s32.totalorder %s311, %s327
    %p329 = scmp.eq.s32.totalorder %s25, 0
    %p330 = por %p328, %p329
    %p331 = scmp.le.s32.totalorder 1, %s19
    %p332 = scmp.lt.s32.totalorder %s19, 5
    %p333 = pnand %p331, %p332
    %p334 = pneg %p333
    // Predicated region
    $region9: #{det_model_forward.5} parent=5 // pred_check
      _
    $region10: #{det_model_forward.5} parent=5 // pred_check_branch
      %336 = sbr.rel (%p333) target = $region12
    $region11: #{det_model_forward.5} parent=5 // pred_region
      %s337 = ssub.s32 %s19, 1
      // Predicated region
      $region13: #{det_model_forward.5} parent=11 // pred_check
        %p338 = pneg %p66
      $region14: #{det_model_forward.5} parent=11 // pred_check_branch
        %340 = sbr.rel (%p338) target = $region16
      $region15: #{det_model_forward.5} parent=11 // pred_region
        _
      $region16: #{det_model_forward.5} parent=11 // pred_fallthru
        _
      // Predicated region
      $region17: #{det_model_forward.5} parent=11 // pred_check
        %p341 = pneg %p87
      $region18: #{det_model_forward.5} parent=11 // pred_check_branch
        %343 = sbr.rel (%p341) target = $region20
      $region19: #{det_model_forward.5} parent=11 // pred_region
        _
      $region20: #{det_model_forward.5} parent=11 // pred_fallthru
        _
      // Predicated region
      $region21: #{det_model_forward.5} parent=11 // pred_check
        %p344 = pneg %p108
      $region22: #{det_model_forward.5} parent=11 // pred_check_branch
        %346 = sbr.rel (%p344) target = $region24
      $region23: #{det_model_forward.5} parent=11 // pred_region
        _
      $region24: #{det_model_forward.5} parent=11 // pred_fallthru
        _
      // Predicated region
      $region25: #{det_model_forward.5} parent=11 // pred_check
        %p347 = pneg %p129
      $region26: #{det_model_forward.5} parent=11 // pred_check_branch
        %349 = sbr.rel (%p347) target = $region28
      $region27: #{det_model_forward.5} parent=11 // pred_region
        _
      $region28: #{det_model_forward.5} parent=11 // pred_fallthru
        _
      // Predicated region
      $region29: #{det_model_forward.5} parent=11 // pred_check
        %p350 = pneg %p150
      $region30: #{det_model_forward.5} parent=11 // pred_check_branch
        %352 = sbr.rel (%p350) target = $region32
      $region31: #{det_model_forward.5} parent=11 // pred_region
        _
      $region32: #{det_model_forward.5} parent=11 // pred_fallthru
        _
      // Predicated region
      $region33: #{det_model_forward.5} parent=11 // pred_check
        %p353 = pneg %p171
      $region34: #{det_model_forward.5} parent=11 // pred_check_branch
        %355 = sbr.rel (%p353) target = $region36
      $region35: #{det_model_forward.5} parent=11 // pred_region
        _
      $region36: #{det_model_forward.5} parent=11 // pred_fallthru
        _
      // Predicated region
      $region37: #{det_model_forward.5} parent=11 // pred_check
        %p356 = pneg %p192
      $region38: #{det_model_forward.5} parent=11 // pred_check_branch
        %358 = sbr.rel (%p356) target = $region40
      $region39: #{det_model_forward.5} parent=11 // pred_region
        _
      $region40: #{det_model_forward.5} parent=11 // pred_fallthru
        _
      // Predicated region
      $region41: #{det_model_forward.5} parent=11 // pred_check
        %p359 = pneg %p213
      $region42: #{det_model_forward.5} parent=11 // pred_check_branch
        %361 = sbr.rel (%p359) target = $region44
      $region43: #{det_model_forward.5} parent=11 // pred_region
        _
      $region44: #{det_model_forward.5} parent=11 // pred_fallthru
        _
      // Predicated region
      $region45: #{det_model_forward.5} parent=11 // pred_check
        %p362 = pneg %p234
      $region46: #{det_model_forward.5} parent=11 // pred_check_branch
        %364 = sbr.rel (%p362) target = $region48
      $region47: #{det_model_forward.5} parent=11 // pred_region
        _
      $region48: #{det_model_forward.5} parent=11 // pred_fallthru
        _
      // Predicated region
      $region49: #{det_model_forward.5} parent=11 // pred_check
        %p365 = pneg %p255
      $region50: #{det_model_forward.5} parent=11 // pred_check_branch
        %367 = sbr.rel (%p365) target = $region52
      $region51: #{det_model_forward.5} parent=11 // pred_region
        _
      $region52: #{det_model_forward.5} parent=11 // pred_fallthru
        _
      // Predicated region
      $region53: #{det_model_forward.5} parent=11 // pred_check
        %p368 = pneg %p276
      $region54: #{det_model_forward.5} parent=11 // pred_check_branch
        %370 = sbr.rel (%p368) target = $region56
      $region55: #{det_model_forward.5} parent=11 // pred_region
        _
      $region56: #{det_model_forward.5} parent=11 // pred_fallthru
        _
      // Predicated region
      $region57: #{det_model_forward.5} parent=11 // pred_check
        %p371 = pneg %p297
      $region58: #{det_model_forward.5} parent=11 // pred_check_branch
        %373 = sbr.rel (%p371) target = $region60
      $region59: #{det_model_forward.5} parent=11 // pred_region
        _
      $region60: #{det_model_forward.5} parent=11 // pred_fallthru
        _
    $region12: #{det_model_forward.5} parent=5 // pred_fallthru
      _
    %p374 = scmp.lt.s32.totalorder %s19, 4
    // Predicated region
    $region61: #{det_model_forward.5} parent=5 // pred_check
      %p375 = pneg %p374
    $region62: #{det_model_forward.5} parent=5 // pred_check_branch
      %377 = sbr.rel (%p375) target = $region64
    $region63: #{det_model_forward.5} parent=5 // pred_region
      // Predicated region
      $region65: #{det_model_forward.5} parent=63 // pred_check
        %p378 = pneg %p39
      $region66: #{det_model_forward.5} parent=63 // pred_check_branch
        %380 = sbr.rel (%p378) target = $region68
      $region67: #{det_model_forward.5} parent=63 // pred_region
        %p381 = scmp.lt.s32.totalorder %s19, 3
        %s382 = scalar_select %p381, %s19, 3
        %s383 = smul.addr %s382, 3
        %s384 = smul.addr %s383, 8
        %s385 = scalar_lea.vmem %s0, %s384
      $region68: #{det_model_forward.5} parent=63 // pred_fallthru
        _
    $region64: #{det_model_forward.5} parent=5 // pred_fallthru
      _
    %p386 = scmp.le.s32.totalorder 1, %s19
    %p387 = scmp.lt.s32.totalorder %s19, 5
    %p388 = pnand %p386, %p387
    %p389 = pneg %p388
    // Predicated region
    $region69: #{det_model_forward.5} parent=5 // pred_check
      _
    $region70: #{det_model_forward.5} parent=5 // pred_check_branch
      %391 = sbr.rel (%p388) target = $region72
    $region71: #{det_model_forward.5} parent=5 // pred_region
      %s392 = ssub.s32 %s19, 1
      %p393 = scmp.lt.s32.totalorder %s24, 3
      %s394 = scalar_select %p393, %s24, 3
      %s395 = smul.addr %s394, 3
      %s396 = smul.addr %s395, 8
      %s397 = scalar_lea.vmem %s0, %s396
      %p398 = pneg %p45
      %p399 = pneg %p42
      %p400 = pneg %p66
      %p401 = pneg %p63
      %p402 = pneg %p87
      %p403 = pneg %p84
      %p404 = pneg %p108
      %p405 = pneg %p105
      %p406 = pneg %p129
      %p407 = pneg %p126
      %p408 = pneg %p150
      %p409 = pneg %p147
      %p410 = pneg %p171
      %p411 = pneg %p168
      %p412 = pneg %p192
      %p413 = pneg %p189
      %p414 = pneg %p213
      %p415 = pneg %p210
      %p416 = pneg %p234
      %p417 = pneg %p231
      %p418 = pneg %p255
      %p419 = pneg %p252
      %p420 = pneg %p276
      %p421 = pneg %p273
      %p422 = pneg %p297
      %p423 = pneg %p294
      %p424 = pneg %p323
      %p425 = pneg %p320
      %p426 = scmp.lt.s32.totalorder %s24, 3
      %s427 = scalar_select %p426, %s24, 3
      %s428 = smul.addr %s427, 3
      %s429 = smul.addr %s428, 8
      %s430 = scalar_lea.vmem %s13, %s429
      %p431 = scmp.lt.s32.totalorder %s24, 3
      %s432 = scalar_select %p431, %s24, 3
      %s433 = smul.addr %s432, 3
      %s434 = smul.addr %s433, 8
      %s435 = scalar_lea.vmem %s0, %s434
      %p436 = scmp.lt.s32.totalorder %s24, 3
      %s437 = scalar_select %p436, %s24, 3
      %s438 = smul.addr %s437, 3
      %s439 = smul.addr %s438, 8
      %s440 = scalar_lea.vmem %s13, %s439
      %v442 = vld [vmem:[%s435] sm:$0xff]
      %v443 = vld [vmem:[%s435 + $0x8] sm:$0xff]
      %v444 = vld [vmem:[%s435 + $0x10] sm:$0xff]
      %v445 = vld [vmem:[%s1] sm:$0x1]
      %v446 = vld [vmem:[%s2] sm:$0x1]
      %vm447 = vcmask 261120
      %v448 = vsel %vm447, %v442, 0.0
      %449 = vadd.xlane.f32.xlu0 %v448
      %v450 = vpop.xlane.xlu0 %449
      %v451 = vsel %vm447, %v443, 0.0
      %452 = vadd.xlane.f32.xlu0 %v451
      %v453 = vpop.xlane.xlu0 %452
      %v454 = vsel %vm447, %v444, 0.0
      %455 = vadd.xlane.f32.xlu0 %v454
      %v456 = vpop.xlane.xlu0 %455
      %v457 = vrcp.pop 32.0
      %v458 = vmul.f32 %v450, %v457
      %v459 = vmul.f32 %v453, %v457
      %v460 = vmul.f32 %v456, %v457
      %v461 = vsub.f32 %v442, %v458
      %v462 = vsub.f32 %v443, %v459
      %v463 = vsub.f32 %v444, %v460
      %v464 = vmul.f32 %v461, %v461
      %v465 = vmul.f32 %v462, %v462
      %v466 = vmul.f32 %v463, %v463
      %v467 = vsel %vm447, %v464, 0.0
      %468 = vadd.xlane.f32.xlu0 %v467
      %v469 = vpop.xlane.xlu0 %468
      %v470 = vsel %vm447, %v465, 0.0
      %471 = vadd.xlane.f32.xlu0 %v470
      %v472 = vpop.xlane.xlu0 %471
      %v473 = vsel %vm447, %v466, 0.0
      %474 = vadd.xlane.f32.xlu0 %v473
      %v475 = vpop.xlane.xlu0 %474
      %v476 = vmul.f32 %v469, %v457
      %v477 = vmul.f32 %v472, %v457
      %v478 = vmul.f32 %v475, %v457
      %v479 = vadd.f32 %v476, 1e-06
      %v480 = vadd.f32 %v477, 1e-06
      %v481 = vadd.f32 %v478, 1e-06
      %v482 = vrsqrt.pop %v479
      %v483 = vrsqrt.pop %v480
      %v484 = vrsqrt.pop %v481
      %v485 = vmul.f32 %v461, %v482
      %v486 = vmul.f32 %v462, %v483
      %v487 = vmul.f32 %v463, %v484
      %v489 = vlaneseq
      %v490 = vshrl.u32 %v489, 7
      %v491 = vsub.s32 0, %v490
      %v492 = vrot.slane %v445, %v491
      %v494 = vmul.f32 %v485, %v492
      %v495 = vmul.f32 %v486, %v492
      %v496 = vmul.f32 %v487, %v492
      %v498 = vlaneseq
      %v499 = vshrl.u32 %v498, 7
      %v500 = vsub.s32 0, %v499
      %v501 = vrot.slane %v446, %v500
      %v503 = vadd.f32 %v494, %v501
      %v504 = vadd.f32 %v495, %v501
      %v505 = vadd.f32 %v496, %v501
      %v506 = vld [vmem:[%s3] sm:$0xff]
      %v507 = vld [vmem:[%s3 + $0x8] sm:$0xff]
      %v508 = vld [vmem:[%s3 + $0x10] sm:$0xff]
      %v509 = vld [vmem:[%s3 + $0x18] sm:$0xff]
      %v510 = vpack.c.bf16 %v504, %v503
      %v511 = vpack.c.bf16 %v505, %v505
      %v512 = vpack.c.bf16 %v507, %v506
      %v513 = vpack.c.bf16 %v509, %v508
      %v514 = vld [vmem:[%s4] sm:$0x1]
      %v516 = vlaneseq
      %v517 = vshrl.u32 %v516, 7
      %v518 = vsub.s32 0, %v517
      %v519 = vrot.slane %v514, %v518
      %v522 = vsel %vm447, %v510, 0
      %v525 = vsel %vm447, %v511, 0
      %527 = vmatprep.subr.bf16.mxu0 0
      %528 = vmatpush1.bf16.msra.mxu0 %v512
      %529 = vmatprep.subr.bf16.mxu0 0
      %530 = vmatpush1.bf16.msra.mxu0 %v513
      %531 = vmatprep.subr.bf16.mxu0 0
      %532 = vmatpush1.bf16.msra.mxu0 0
      %533 = vmatprep.subr.bf16.mxu0 0
      %534 = vmatpush1.bf16.msra.mxu0 0
      %535 = vmatprep.subr.bf16.mxu0 0
      %536 = vmatpush1.bf16.msra.mxu0 0
      %537 = vmatprep.subr.bf16.mxu0 0
      %538 = vmatpush1.bf16.msra.mxu0 0
      %539 = vmatprep.subr.bf16.mxu0 0
      %540 = vmatpush1.bf16.msra.mxu0 0
      %541 = vmatprep.subr.bf16.mxu0 0
      %542 = vmatpush1.bf16.msra.mxu0 0
      %543 = vmatprep.subr.bf16.mxu0 0
      %544 = vmatpush1.bf16.msra.mxu0 0
      %545 = vmatprep.subr.bf16.mxu0 0
      %546 = vmatpush1.bf16.msra.mxu0 0
      %547 = vmatprep.subr.bf16.mxu0 0
      %548 = vmatpush1.bf16.msra.mxu0 0
      %549 = vmatprep.subr.bf16.mxu0 0
      %550 = vmatpush1.bf16.msra.mxu0 0
      %551 = vmatprep.subr.bf16.mxu0 0
      %552 = vmatpush1.bf16.msra.mxu0 0
      %553 = vmatprep.subr.bf16.mxu0 0
      %554 = vmatpush1.bf16.msra.mxu0 0
      %555 = vmatprep.subr.bf16.mxu0 0
      %556 = vmatpush1.bf16.msra.mxu0 0
      %557 = vmatprep.subr.bf16.mxu0 0
      %558 = vmatpush1.bf16.msra.mxu0 0
      %559 = vmatprep.mubr.bf16.mxu0 0
      %560 = vmatmul.mubr.bf16.gmra.mrb[0].mxu0 %v522
      %v561 = vpop.f32.mrb[0].mxu0
      %v562 = vadd.f32 %v519, %v561
      %v563 = vpop.f32.mrb[0].mxu0
      %v564 = vpop.f32.mrb[0].mxu0
      %v565 = vadd.f32 %v519, %v564
      %v566 = vpop.f32.mrb[0].mxu0
      %567 = vmatprep.mubr.bf16.mxu0 0
      %568 = vmatmul.mubr.bf16.gmra.mrb[0].mxu0 %v525
      %v569 = vpop.f32.mrb[0].mxu0
      %v570 = vadd.f32 %v519, %v569
      %v571 = vpop.f32.mrb[0].mxu0
      %v572 = vpop.f32.mrb[0].mxu0
      %v573 = vpop.f32.mrb[0].mxu0
      %574 = vdwg.mxu0
      %v575 = vlaneseq
      %v576 = vand.u32 %v575, 127
      %vm577 = vcmp.lt.s32.totalorder %v576, 17
      %v578 = vpack.c.bf16 %v565, %v562
      %v579 = vpack.c.bf16 %v570, %v570
      %582 = vrot.lane.b32.xlu0 %v578, 96
      %v583 = vpop.permute.xlu0 %582
      %584 = vrot.lane.b32.xlu0 %v579, 96
      %v585 = vpop.permute.xlu0 %584
      %vm586 = vcmask 130048
      %v588 = vsel %vm586, %v578, 0
      %v591 = vsel %vm586, %v579, 0
      %v594 = vsel %vm586, %v583, 0
      %v597 = vsel %vm586, %v585, 0
      %599 = vmatprep.subr.bf16.mxu0 0
      %600 = vmatpush1.bf16.xpose.msra.mxu0 %v594
      %601 = vmatprep.subr.bf16.mxu0 0
      %602 = vmatpush1.bf16.xpose.msra.mxu0 %v597
      %603 = vmatprep.subr.bf16.mxu0 0
      %604 = vmatpush1.bf16.xpose.msra.mxu0 0
      %605 = vmatprep.subr.bf16.mxu0 0
      %606 = vmatpush1.bf16.xpose.msra.mxu0 0
      %607 = vmatprep.subr.bf16.mxu0 0
      %608 = vmatpush1.bf16.xpose.msra.mxu0 0
      %609 = vmatprep.subr.bf16.mxu0 0
      %610 = vmatpush1.bf16.xpose.msra.mxu0 0
      %611 = vmatprep.subr.bf16.mxu0 0
      %612 = vmatpush1.bf16.xpose.msra.mxu0 0
      %613 = vmatprep.subr.bf16.mxu0 0
      %614 = vmatpush1.bf16.xpose.msra.mxu0 0
      %615 = vmatprep.subr.bf16.mxu0 0
      %616 = vmatpush1.bf16.xpose.msra.mxu0 0
      %617 = vmatprep.subr.bf16.mxu0 0
      %618 = vmatpush1.bf16.xpose.msra.mxu0 0
      %619 = vmatprep.subr.bf16.mxu0 0
      %620 = vmatpush1.bf16.xpose.msra.mxu0 0
      %621 = vmatprep.subr.bf16.mxu0 0
      %622 = vmatpush1.bf16.xpose.msra.mxu0 0
      %623 = vmatprep.subr.bf16.mxu0 0
      %624 = vmatpush1.bf16.xpose.msra.mxu0 0
      %625 = vmatprep.subr.bf16.mxu0 0
      %626 = vmatpush1.bf16.xpose.msra.mxu0 0
      %627 = vmatprep.subr.bf16.mxu0 0
      %628 = vmatpush1.bf16.xpose.msra.mxu0 0
      %629 = vmatprep.subr.bf16.mxu0 0
      %630 = vmatpush1.bf16.xpose.msra.mxu0 0
      %631 = vmatprep.mubr.bf16.mxu0 0
      %632 = vmatmul.mubr.bf16.gmra.mrb[0].mxu0 %v588
      %v633 = vpop.f32.mrb[0].mxu0
      %v634 = vadd.f32 0.0, %v633
      %v635 = vpop.f32.mrb[0].mxu0
      %v636 = vpop.f32.mrb[0].mxu0
      %v637 = vadd.f32 0.0, %v636
      %v638 = vpop.f32.mrb[0].mxu0
      %639 = vmatprep.mubr.bf16.mxu0 0
      %640 = vmatmul.mubr.bf16.gmra.mrb[0].mxu0 %v591
      %v641 = vpop.f32.mrb[0].mxu0
      %v642 = vadd.f32 0.0, %v641
      %v643 = vpop.f32.mrb[0].mxu0
      %v644 = vpop.f32.mrb[0].mxu0
      %v645 = vpop.f32.mrb[0].mxu0
      %646 = vdwg.mxu0
      %v647 = vmul.f32 %v634, 0.25
      %v648 = vmul.f32 %v637, 0.25
      %v649 = vmul.f32 %v642, 0.25
      %v650 = vsel %vm577, %v647, -1e+30
      %v651 = vsel %vm577, %v648, -1e+30
      %v652 = vsel %vm577, %v649, -1e+30
      %vm653 = vcmask 195584
      %v654 = vsel %vm653, %v650, -inf
      %655 = vmax.xlane.f32.xlu0 %v654
      %v656 = vpop.xlane.xlu0 %655
      %v657 = vsel %vm653, %v651, -inf
      %658 = vmax.xlane.f32.xlu0 %v657
      %v659 = vpop.xlane.xlu0 %658
      %v660 = vsel %vm653, %v652, -inf
      %661 = vmax.xlane.f32.xlu0 %v660
      %v662 = vpop.xlane.xlu0 %661
      %v663 = vsub.f32 %v650, %v656
      %v664 = vsub.f32 %v651, %v659
      %v665 = vsub.f32 %v652, %v662
      %v666 = vmul.f32 %v663, 1.442695
      %v667 = vpow.pop %v666
      %v668 = vmul.f32 %v664, 1.442695
      %v669 = vpow.pop %v668
      %v670 = vmul.f32 %v665, 1.442695
      %v671 = vpow.pop %v670
      %v672 = vsel %vm653, %v667, 0.0
      %673 = vadd.xlane.f32.xlu0 %v672
      %v674 = vpop.xlane.xlu0 %673
      %v675 = vsel %vm653, %v669, 0.0
      %676 = vadd.xlane.f32.xlu0 %v675
      %v677 = vpop.xlane.xlu0 %676
      %v678 = vsel %vm653, %v671, 0.0
      %679 = vadd.xlane.f32.xlu0 %v678
      %v680 = vpop.xlane.xlu0 %679
      %v681 = vrcp.pop %v674
      %v682 = vrcp.pop %v677
      %v683 = vrcp.pop %v680
      %v684 = vmul.f32 %v667, %v681
      %v685 = vmul.f32 %v669, %v682
      %v686 = vmul.f32 %v671, %v683
      %v687 = vpack.c.bf16 %v685, %v684
      %v688 = vpack.c.bf16 %v686, %v686
      %689 = vrot.lane.b32.xlu0 %v578, 64
      %v690 = vpop.permute.xlu0 %689
      %691 = vrot.lane.b32.xlu0 %v579, 64
      %v692 = vpop.permute.xlu0 %691
      %v695 = vsel %vm653, %v687, 0
      %v698 = vsel %vm653, %v688, 0
      %vm700 = vcmask 1043456
      %v702 = vsel %vm700, %v692, 0
      %704 = vmatprep.subr.bf16.mxu0 0
      %705 = vmatpush1.bf16.msra.mxu0 %v690
      %706 = vmatprep.subr.bf16.mxu0 0
      %707 = vmatpush1.bf16.msra.mxu0 %v702
      %708 = vmatprep.subr.bf16.mxu0 0
      %709 = vmatpush1.bf16.msra.mxu0 0
      %710 = vmatprep.subr.bf16.mxu0 0
      %711 = vmatpush1.bf16.msra.mxu0 0
      %712 = vmatprep.subr.bf16.mxu0 0
      %713 = vmatpush1.bf16.msra.mxu0 0
      %714 = vmatprep.subr.bf16.mxu0 0
      %715 = vmatpush1.bf16.msra.mxu0 0
      %716 = vmatprep.subr.bf16.mxu0 0
      %717 = vmatpush1.bf16.msra.mxu0 0
      %718 = vmatprep.subr.bf16.mxu0 0
      %719 = vmatpush1.bf16.msra.mxu0 0
      %720 = vmatprep.subr.bf16.mxu0 0
      %721 = vmatpush1.bf16.msra.mxu0 0
      %722 = vmatprep.subr.bf16.mxu0 0
      %723 = vmatpush1.bf16.msra.mxu0 0
      %724 = vmatprep.subr.bf16.mxu0 0
      %725 = vmatpush1.bf16.msra.mxu0 0
      %726 = vmatprep.subr.bf16.mxu0 0
      %727 = vmatpush1.bf16.msra.mxu0 0
      %728 = vmatprep.subr.bf16.mxu0 0
      %729 = vmatpush1.bf16.msra.mxu0 0
      %730 = vmatprep.subr.bf16.mxu0 0
      %731 = vmatpush1.bf16.msra.mxu0 0
      %732 = vmatprep.subr.bf16.mxu0 0
      %733 = vmatpush1.bf16.msra.mxu0 0
      %734 = vmatprep.subr.bf16.mxu0 0
      %735 = vmatpush1.bf16.msra.mxu0 0
      %736 = vmatprep.mubr.bf16.mxu0 0
      %737 = vmatmul.mubr.bf16.gmra.mrb[0].mxu0 %v695
      %v738 = vpop.f32.mrb[0].mxu0
      %v739 = vadd.f32 0.0, %v738
      %v740 = vpop.f32.mrb[0].mxu0
      %v741 = vpop.f32.mrb[0].mxu0
      %v742 = vadd.f32 0.0, %v741
      %v743 = vpop.f32.mrb[0].mxu0
      %744 = vmatprep.mubr.bf16.mxu0 0
      %745 = vmatmul.mubr.bf16.gmra.mrb[0].mxu0 %v698
      %v746 = vpop.f32.mrb[0].mxu0
      %v747 = vadd.f32 0.0, %v746
      %v748 = vpop.f32.mrb[0].mxu0
      %v749 = vpop.f32.mrb[0].mxu0
      %v750 = vpop.f32.mrb[0].mxu0
      %751 = vdwg.mxu0
      %752 = vrot.lane.b32.xlu0 %v578, 112
      %v753 = vpop.permute.xlu0 %752
      %754 = vrot.lane.b32.xlu0 %v579, 112
      %v755 = vpop.permute.xlu0 %754
      %756 = vrot.lane.b32.xlu0 %v578, 80
      %v757 = vpop.permute.xlu0 %756
      %758 = vrot.lane.b32.xlu0 %v579, 80
      %v759 = vpop.permute.xlu0 %758
      %v761 = vsel %vm586, %v753, 0
      %v764 = vsel %vm586, %v755, 0
      %v767 = vsel %vm586, %v757, 0
      %v770 = vsel %vm586, %v759, 0
      %772 = vmatprep.subr.bf16.mxu0 0
      %773 = vmatpush1.bf16.xpose.msra.mxu0 %v767
      %774 = vmatprep.subr.bf16.mxu0 0
      %775 = vmatpush1.bf16.xpose.msra.mxu0 %v770
      %776 = vmatprep.subr.bf16.mxu0 0
      %777 = vmatpush1.bf16.xpose.msra.mxu0 0
      %778 = vmatprep.subr.bf16.mxu0 0
      %779 = vmatpush1.bf16.xpose.msra.mxu0 0
      %780 = vmatprep.subr.bf16.mxu0 0
      %781 = vmatpush1.bf16.xpose.msra.mxu0 0
      %782 = vmatprep.subr.bf16.mxu0 0
      %783 = vmatpush1.bf16.xpose.msra.mxu0 0
      %784 = vmatprep.subr.bf16.mxu0 0
      %785 = vmatpush1.bf16.xpose.msra.mxu0 0
      %786 = vmatprep.subr.bf16.mxu0 0
      %787 = vmatpush1.bf16.xpose.msra.mxu0 0
      %788 = vmatprep.subr.bf16.mxu0 0
      %789 = vmatpush1.bf16.xpose.msra.mxu0 0
      %790 = vmatprep.subr.bf16.mxu0 0
      %791 = vmatpush1.bf16.xpose.msra.mxu0 0
      %792 = vmatprep.subr.bf16.mxu0 0
      %793 = vmatpush1.bf16.xpose.msra.mxu0 0
      %794 = vmatprep.subr.bf16.mxu0 0
      %795 = vmatpush1.bf16.xpose.msra.mxu0 0
      %796 = vmatprep.subr.bf16.mxu0 0
      %797 = vmatpush1.bf16.xpose.msra.mxu0 0
      %798 = vmatprep.subr.bf16.mxu0 0
      %799 = vmatpush1.bf16.xpose.msra.mxu0 0
      %800 = vmatprep.subr.bf16.mxu0 0
      %801 = vmatpush1.bf16.xpose.msra.mxu0 0
      %802 = vmatprep.subr.bf16.mxu0 0
      %803 = vmatpush1.bf16.xpose.msra.mxu0 0
      %804 = vmatprep.mubr.bf16.mxu0 0
      %805 = vmatmul.mubr.bf16.gmra.mrb[0].mxu0 %v761
      %v806 = vpop.f32.mrb[0].mxu0
      %v807 = vadd.f32 0.0, %v806
      %v808 = vpop.f32.mrb[0].mxu0
      %v809 = vpop.f32.mrb[0].mxu0
      %v810 = vadd.f32 0.0, %v809
      %v811 = vpop.f32.mrb[0].mxu0
      %812 = vmatprep.mubr.bf16.mxu0 0
      %813 = vmatmul.mubr.bf16.gmra.mrb[0].mxu0 %v764
      %v814 = vpop.f32.mrb[0].mxu0
      %v815 = vadd.f32 0.0, %v814
      %v816 = vpop.f32.mrb[0].mxu0
      %v817 = vpop.f32.mrb[0].mxu0
      %v818 = vpop.f32.mrb[0].mxu0
      %819 = vdwg.mxu0
      %v820 = vmul.f32 %v807, 0.25
      %v821 = vmul.f32 %v810, 0.25
      %v822 = vmul.f32 %v815, 0.25
      %v823 = vsel %vm577, %v820, -1e+30
      %v824 = vsel %vm577, %v821, -1e+30
      %v825 = vsel %vm577, %v822, -1e+30
      %v826 = vsel %vm653, %v823, -inf
      %827 = vmax.xlane.f32.xlu0 %v826
      %v828 = vpop.xlane.xlu0 %827
      %v829 = vsel %vm653, %v824, -inf
      %830 = vmax.xlane.f32.xlu0 %v829
      %v831 = vpop.xlane.xlu0 %830
      %v832 = vsel %vm653, %v825, -inf
      %833 = vmax.xlane.f32.xlu0 %v832
      %v834 = vpop.xlane.xlu0 %833
      %v835 = vsub.f32 %v823, %v828
      %v836 = vsub.f32 %v824, %v831
      %v837 = vsub.f32 %v825, %v834
      %v838 = vmul.f32 %v835, 1.442695
      %v839 = vpow.pop %v838
      %v840 = vmul.f32 %v836, 1.442695
      %v841 = vpow.pop %v840
      %v842 = vmul.f32 %v837, 1.442695
      %v843 = vpow.pop %v842
      %v844 = vsel %vm653, %v839, 0.0
      %845 = vadd.xlane.f32.xlu0 %v844
      %v846 = vpop.xlane.xlu0 %845
      %v847 = vsel %vm653, %v841, 0.0
      %848 = vadd.xlane.f32.xlu0 %v847
      %v849 = vpop.xlane.xlu0 %848
      %v850 = vsel %vm653, %v843, 0.0
      %851 = vadd.xlane.f32.xlu0 %v850
      %v852 = vpop.xlane.xlu0 %851
      %v853 = vrcp.pop %v846
      %v854 = vrcp.pop %v849
      %v855 = vrcp.pop %v852
      %v856 = vmul.f32 %v839, %v853
      %v857 = vmul.f32 %v841, %v854
      %v858 = vmul.f32 %v843, %v855
      %v859 = vpack.c.bf16 %v857, %v856
      %v860 = vpack.c.bf16 %v858, %v858
      %861 = vrot.lane.b32.xlu0 %v578, 48
      %v862 = vpop.permute.xlu0 %861
      %863 = vrot.lane.b32.xlu0 %v579, 48
      %v864 = vpop.permute.xlu0 %863
      %v867 = vsel %vm653, %v859, 0
      %v870 = vsel %vm653, %v860, 0
      %v873 = vsel %vm700, %v864, 0
      %875 = vmatprep.subr.bf16.mxu0 0
      %876 = vmatpush1.bf16.msra.mxu0 %v862
      %877 = vmatprep.subr.bf16.mxu0 0
      %878 = vmatpush1.bf16.msra.mxu0 %v873
      %879 = vmatprep.subr.bf16.mxu0 0
      %880 = vmatpush1.bf16.msra.mxu0 0
      %881 = vmatprep.subr.bf16.mxu0 0
      %882 = vmatpush1.bf16.msra.mxu0 0
      %883 = vmatprep.subr.bf16.mxu0 0
      %884 = vmatpush1.bf16.msra.mxu0 0
      %885 = vmatprep.subr.bf16.mxu0 0
      %886 = vmatpush1.bf16.msra.mxu0 0
      %887 = vmatprep.subr.bf16.mxu0 0
      %888 = vmatpush1.bf16.msra.mxu0 0
      %889 = vmatprep.subr.bf16.mxu0 0
      %890 = vmatpush1.bf16.msra.mxu0 0
      %891 = vmatprep.subr.bf16.mxu0 0
      %892 = vmatpush1.bf16.msra.mxu0 0
      %893 = vmatprep.subr.bf16.mxu0 0
      %894 = vmatpush1.bf16.msra.mxu0 0
      %895 = vmatprep.subr.bf16.mxu0 0
      %896 = vmatpush1.bf16.msra.mxu0 0
      %897 = vmatprep.subr.bf16.mxu0 0
      %898 = vmatpush1.bf16.msra.mxu0 0
      %899 = vmatprep.subr.bf16.mxu0 0
      %900 = vmatpush1.bf16.msra.mxu0 0
      %901 = vmatprep.subr.bf16.mxu0 0
      %902 = vmatpush1.bf16.msra.mxu0 0
      %903 = vmatprep.subr.bf16.mxu0 0
      %904 = vmatpush1.bf16.msra.mxu0 0
      %905 = vmatprep.subr.bf16.mxu0 0
      %906 = vmatpush1.bf16.msra.mxu0 0
      %907 = vmatprep.mubr.bf16.mxu0 0
      %908 = vmatmul.mubr.bf16.gmra.mrb[0].mxu0 %v867
      %v909 = vpop.f32.mrb[0].mxu0
      %v910 = vadd.f32 0.0, %v909
      %v911 = vpop.f32.mrb[0].mxu0
      %v912 = vpop.f32.mrb[0].mxu0
      %v913 = vadd.f32 0.0, %v912
      %v914 = vpop.f32.mrb[0].mxu0
      %915 = vmatprep.mubr.bf16.mxu0 0
      %916 = vmatmul.mubr.bf16.gmra.mrb[0].mxu0 %v870
      %v917 = vpop.f32.mrb[0].mxu0
      %v918 = vadd.f32 0.0, %v917
      %v919 = vpop.f32.mrb[0].mxu0
      %v920 = vpop.f32.mrb[0].mxu0
      %v921 = vpop.f32.mrb[0].mxu0
      %922 = vdwg.mxu0
      %926 = vrot.lane.b32.xlu0 %v910, 16
      %v927 = vpop.permute.xlu0 %926
      %928 = vrot.lane.b32.xlu0 %v913, 16
      %v929 = vpop.permute.xlu0 %928
      %930 = vrot.lane.b32.xlu0 %v918, 16
      %v931 = vpop.permute.xlu0 %930
      %v935 = vsel %vm586, %v739, %v927
      %v936 = vsel %vm586, %v742, %v929
      %v937 = vsel %vm586, %v747, %v931
      %v938 = vld [vmem:[%s5] sm:$0xff]
      %v939 = vld [vmem:[%s5 + $0x8] sm:$0xff]
      %v940 = vld [vmem:[%s5 + $0x10] sm:$0xff]
      %v941 = vld [vmem:[%s5 + $0x18] sm:$0xff]
      %v942 = vpack.c.bf16 %v936, %v935
      %v943 = vpack.c.bf16 %v937, %v937
      %v944 = vpack.c.bf16 %v939, %v938
      %v945 = vpack.c.bf16 %v941, %v940
      %v947 = vsel %vm447, %v942, 0
      %v950 = vsel %vm447, %v943, 0
      %952 = vmatprep.subr.bf16.mxu0 0
      %953 = vmatpush1.bf16.msra.mxu0 %v944
      %954 = vmatprep.subr.bf16.mxu0 0
      %955 = vmatpush1.bf16.msra.mxu0 %v945
      %956 = vmatprep.subr.bf16.mxu0 0
      %957 = vmatpush1.bf16.msra.mxu0 0
      %958 = vmatprep.subr.bf16.mxu0 0
      %959 = vmatpush1.bf16.msra.mxu0 0
      %960 = vmatprep.subr.bf16.mxu0 0
      %961 = vmatpush1.bf16.msra.mxu0 0
      %962 = vmatprep.subr.bf16.mxu0 0
      %963 = vmatpush1.bf16.msra.mxu0 0
      %964 = vmatprep.subr.bf16.mxu0 0
      %965 = vmatpush1.bf16.msra.mxu0 0
      %966 = vmatprep.subr.bf16.mxu0 0
      %967 = vmatpush1.bf16.msra.mxu0 0
      %968 = vmatprep.subr.bf16.mxu0 0
      %969 = vmatpush1.bf16.msra.mxu0 0
      %970 = vmatprep.subr.bf16.mxu0 0
      %971 = vmatpush1.bf16.msra.mxu0 0
      %972 = vmatprep.subr.bf16.mxu0 0
      %973 = vmatpush1.bf16.msra.mxu0 0
      %974 = vmatprep.subr.bf16.mxu0 0
      %975 = vmatpush1.bf16.msra.mxu0 0
      %976 = vmatprep.subr.bf16.mxu0 0
      %977 = vmatpush1.bf16.msra.mxu0 0
      %978 = vmatprep.subr.bf16.mxu0 0
      %979 = vmatpush1.bf16.msra.mxu0 0
      %980 = vmatprep.subr.bf16.mxu0 0
      %981 = vmatpush1.bf16.msra.mxu0 0
      %982 = vmatprep.subr.bf16.mxu0 0
      %983 = vmatpush1.bf16.msra.mxu0 0
      %984 = vmatprep.mubr.bf16.mxu0 0
      %985 = vmatmul.mubr.bf16.gmra.mrb[0].mxu0 %v947
      %v986 = vpop.f32.mrb[0].mxu0
      %v987 = vadd.f32 0.0, %v986
      %v988 = vpop.f32.mrb[0].mxu0
      %v989 = vpop.f32.mrb[0].mxu0
      %v990 = vadd.f32 0.0, %v989
      %v991 = vpop.f32.mrb[0].mxu0
      %992 = vmatprep.mubr.bf16.mxu0 0
      %993 = vmatmul.mubr.bf16.gmra.mrb[0].mxu0 %v950
      %v994 = vpop.f32.mrb[0].mxu0
      %v995 = vadd.f32 0.0, %v994
      %v996 = vpop.f32.mrb[0].mxu0
      %v997 = vpop.f32.mrb[0].mxu0
      %v998 = vpop.f32.mrb[0].mxu0
      %999 = vdwg.mxu0
      %v1000 = vadd.f32 %v442, %v987
      %v1001 = vadd.f32 %v443, %v990
      %v1002 = vadd.f32 %v444, %v995
      %v1003 = vld [vmem:[%s6] sm:$0x1]
      %v1005 = vlaneseq
      %v1006 = vshrl.u32 %v1005, 7
      %v1007 = vsub.s32 0, %v1006
      %v1008 = vrot.slane %v1003, %v1007
      %v1010 = vadd.f32 %v1000, %v1008
      %v1011 = vadd.f32 %v1001, %v1008
      %v1012 = vadd.f32 %v1002, %v1008
      %v1013 = vld [vmem:[%s7] sm:$0x1]
      %v1014 = vld [vmem:[%s8] sm:$0x1]
      %v1015 = vsel %vm447, %v1010, 0.0
      %1016 = vadd.xlane.f32.xlu0 %v1015
      %v1017 = vpop.xlane.xlu0 %1016
      %v1018 = vsel %vm447, %v1011, 0.0
      %1019 = vadd.xlane.f32.xlu0 %v1018
      %v1020 = vpop.xlane.xlu0 %1019
      %v1021 = vsel %vm447, %v1012, 0.0
      %1022 = vadd.xlane.f32.xlu0 %v1021
      %v1023 = vpop.xlane.xlu0 %1022
      %v1024 = vmul.f32 %v1017, %v457
      %v1025 = vmul.f32 %v1020, %v457
      %v1026 = vmul.f32 %v1023, %v457
      %v1027 = vsub.f32 %v1010, %v1024
      %v1028 = vsub.f32 %v1011, %v1025
      %v1029 = vsub.f32 %v1012, %v1026
      %v1030 = vmul.f32 %v1027, %v1027
      %v1031 = vmul.f32 %v1028, %v1028
      %v1032 = vmul.f32 %v1029, %v1029
      %v1033 = vsel %vm447, %v1030, 0.0
      %1034 = vadd.xlane.f32.xlu0 %v1033
      %v1035 = vpop.xlane.xlu0 %1034
      %v1036 = vsel %vm447, %v1031, 0.0
      %1037 = vadd.xlane.f32.xlu0 %v1036
      %v1038 = vpop.xlane.xlu0 %1037
      %v1039 = vsel %vm447, %v1032, 0.0
      %1040 = vadd.xlane.f32.xlu0 %v1039
      %v1041 = vpop.xlane.xlu0 %1040
      %v1042 = vmul.f32 %v1035, %v457
      %v1043 = vmul.f32 %v1038, %v457
      %v1044 = vmul.f32 %v1041, %v457
      %v1045 = vadd.f32 %v1042, 1e-06
      %v1046 = vadd.f32 %v1043, 1e-06
      %v1047 = vadd.f32 %v1044, 1e-06
      %v1048 = vrsqrt.pop %v1045
      %v1049 = vrsqrt.pop %v1046
      %v1050 = vrsqrt.pop %v1047
      %v1051 = vmul.f32 %v1027, %v1048
      %v1052 = vmul.f32 %v1028, %v1049
      %v1053 = vmul.f32 %v1029, %v1050
      %v1055 = vlaneseq
      %v1056 = vshrl.u32 %v1055, 7
      %v1057 = vsub.s32 0, %v1056
      %v1058 = vrot.slane %v1013, %v1057
      %v1060 = vmul.f32 %v1051, %v1058
      %v1061 = vmul.f32 %v1052, %v1058
      %v1062 = vmul.f32 %v1053, %v1058
      %v1064 = vlaneseq
      %v1065 = vshrl.u32 %v1064, 7
      %v1066 = vsub.s32 0, %v1065
      %v1067 = vrot.slane %v1014, %v1066
      %v1069 = vadd.f32 %v1060, %v1067
      %v1070 = vadd.f32 %v1061, %v1067
      %v1071 = vadd.f32 %v1062, %v1067
      %v1072 = vld [vmem:[%s9] sm:$0xff]
      %v1073 = vld [vmem:[%s9 + $0x8] sm:$0xff]
      %v1074 = vld [vmem:[%s9 + $0x10] sm:$0xff]
      %v1075 = vld [vmem:[%s9 + $0x18] sm:$0xff]
      %v1076 = vpack.c.bf16 %v1070, %v1069
      %v1077 = vpack.c.bf16 %v1071, %v1071
      %v1078 = vpack.c.bf16 %v1073, %v1072
      %v1079 = vpack.c.bf16 %v1075, %v1074
      %v1080 = vld [vmem:[%s10] sm:$0x1]
      %v1082 = vlaneseq
      %v1083 = vshrl.u32 %v1082, 7
      %v1084 = vsub.s32 0, %v1083
      %v1085 = vrot.slane %v1080, %v1084
      %v1088 = vsel %vm447, %v1076, 0
      %v1091 = vsel %vm447, %v1077, 0
      %1093 = vmatprep.subr.bf16.mxu0 0
      %1094 = vmatpush1.bf16.msra.mxu0 %v1078
      %1095 = vmatprep.subr.bf16.mxu0 0
      %1096 = vmatpush1.bf16.msra.mxu0 %v1079
      %1097 = vmatprep.subr.bf16.mxu0 0
      %1098 = vmatpush1.bf16.msra.mxu0 0
      %1099 = vmatprep.subr.bf16.mxu0 0
      %1100 = vmatpush1.bf16.msra.mxu0 0
      %1101 = vmatprep.subr.bf16.mxu0 0
      %1102 = vmatpush1.bf16.msra.mxu0 0
      %1103 = vmatprep.subr.bf16.mxu0 0
      %1104 = vmatpush1.bf16.msra.mxu0 0
      %1105 = vmatprep.subr.bf16.mxu0 0
      %1106 = vmatpush1.bf16.msra.mxu0 0
      %1107 = vmatprep.subr.bf16.mxu0 0
      %1108 = vmatpush1.bf16.msra.mxu0 0
      %1109 = vmatprep.subr.bf16.mxu0 0
      %1110 = vmatpush1.bf16.msra.mxu0 0
      %1111 = vmatprep.subr.bf16.mxu0 0
      %1112 = vmatpush1.bf16.msra.mxu0 0
      %1113 = vmatprep.subr.bf16.mxu0 0
      %1114 = vmatpush1.bf16.msra.mxu0 0
      %1115 = vmatprep.subr.bf16.mxu0 0
      %1116 = vmatpush1.bf16.msra.mxu0 0
      %1117 = vmatprep.subr.bf16.mxu0 0
      %1118 = vmatpush1.bf16.msra.mxu0 0
      %1119 = vmatprep.subr.bf16.mxu0 0
      %1120 = vmatpush1.bf16.msra.mxu0 0
      %1121 = vmatprep.subr.bf16.mxu0 0
      %1122 = vmatpush1.bf16.msra.mxu0 0
      %1123 = vmatprep.subr.bf16.mxu0 0
      %1124 = vmatpush1.bf16.msra.mxu0 0
      %1125 = vmatprep.mubr.bf16.mxu0 0
      %1126 = vmatmul.mubr.bf16.gmra.mrb[0].mxu0 %v1088
      %v1127 = vpop.f32.mrb[0].mxu0
      %v1128 = vadd.f32 %v1085, %v1127
      %v1129 = vpop.f32.mrb[0].mxu0
      %v1130 = vpop.f32.mrb[0].mxu0
      %v1131 = vadd.f32 %v1085, %v1130
      %v1132 = vpop.f32.mrb[0].mxu0
      %1133 = vmatprep.mubr.bf16.mxu0 0
      %1134 = vmatmul.mubr.bf16.gmra.mrb[0].mxu0 %v1091
      %v1135 = vpop.f32.mrb[0].mxu0
      %v1136 = vadd.f32 %v1085, %v1135
      %v1137 = vpop.f32.mrb[0].mxu0
      %v1138 = vpop.f32.mrb[0].mxu0
      %v1139 = vpop.f32.mrb[0].mxu0
      %1140 = vdwg.mxu0
      %v1141 = vmul.f32 %v1128, 0.5
      %v1142 = vmul.f32 %v1131, 0.5
      %v1143 = vmul.f32 %v1136, 0.5
      %v1144 = vmul.f32 %v1128, 0.70710677
      %v1145 = vmul.f32 %v1131, 0.70710677
      %v1146 = vmul.f32 %v1136, 0.70710677
      %v1147 = verf.f32.pop %v1144
      %v1148 = verf.f32.pop %v1145
      %v1149 = verf.f32.pop %v1146
      %v1150 = vadd.f32 %v1147, 1.0
      %v1151 = vadd.f32 %v1148, 1.0
      %v1152 = vadd.f32 %v1149, 1.0
      %v1153 = vmul.f32 %v1141, %v1150
      %v1154 = vmul.f32 %v1142, %v1151
      %v1155 = vmul.f32 %v1143, %v1152
      %v1156 = vld [vmem:[%s11] sm:$0xff]
      %v1157 = vld [vmem:[%s11 + $0x8] sm:$0xff]
      %v1158 = vld [vmem:[%s11 + $0x10] sm:$0xff]
      %v1159 = vld [vmem:[%s11 + $0x18] sm:$0xff]
      %v1160 = vld [vmem:[%s11 + $0x20] sm:$0xff]
      %v1161 = vld [vmem:[%s11 + $0x28] sm:$0xff]
      %v1162 = vld [vmem:[%s11 + $0x30] sm:$0xff]
      %v1163 = vld [vmem:[%s11 + $0x38] sm:$0xff]
      %v1164 = vld [vmem:[%s11 + $0x40] sm:$0xff]
      %v1165 = vld [vmem:[%s11 + $0x48] sm:$0xff]
      %v1166 = vld [vmem:[%s11 + $0x50] sm:$0xff]
      %v1167 = vld [vmem:[%s11 + $0x58] sm:$0xff]
      %v1168 = vld [vmem:[%s11 + $0x60] sm:$0xff]
      %v1169 = vld [vmem:[%s11 + $0x68] sm:$0xff]
      %v1170 = vld [vmem:[%s11 + $0x70] sm:$0xff]
      %v1171 = vld [vmem:[%s11 + $0x78] sm:$0xff]
      %v1172 = vpack.c.bf16 %v1154, %v1153
      %v1173 = vpack.c.bf16 %v1155, %v1155
      %v1174 = vpack.c.bf16 %v1157, %v1156
      %v1175 = vpack.c.bf16 %v1159, %v1158
      %v1176 = vpack.c.bf16 %v1161, %v1160
      %v1177 = vpack.c.bf16 %v1163, %v1162
      %v1178 = vpack.c.bf16 %v1165, %v1164
      %v1179 = vpack.c.bf16 %v1167, %v1166
      %v1180 = vpack.c.bf16 %v1169, %v1168
      %v1181 = vpack.c.bf16 %v1171, %v1170
      %1182 = vmatprep.subr.bf16.mxu0 0
      %1183 = vmatpush1.bf16.msra.mxu0 %v1174
      %1184 = vmatprep.subr.bf16.mxu0 0
      %1185 = vmatpush1.bf16.msra.mxu0 %v1175
      %1186 = vmatprep.subr.bf16.mxu0 0
      %1187 = vmatpush1.bf16.msra.mxu0 %v1176
      %1188 = vmatprep.subr.bf16.mxu0 0
      %1189 = vmatpush1.bf16.msra.mxu0 %v1177
      %1190 = vmatprep.subr.bf16.mxu0 0
      %1191 = vmatpush1.bf16.msra.mxu0 %v1178
      %1192 = vmatprep.subr.bf16.mxu0 0
      %1193 = vmatpush1.bf16.msra.mxu0 %v1179
      %1194 = vmatprep.subr.bf16.mxu0 0
      %1195 = vmatpush1.bf16.msra.mxu0 %v1180
      %1196 = vmatprep.subr.bf16.mxu0 0
      %1197 = vmatpush1.bf16.msra.mxu0 %v1181
      %1198 = vmatprep.subr.bf16.mxu0 0
      %1199 = vmatpush1.bf16.msra.mxu0 0
      %1200 = vmatprep.subr.bf16.mxu0 0
      %1201 = vmatpush1.bf16.msra.mxu0 0
      %1202 = vmatprep.subr.bf16.mxu0 0
      %1203 = vmatpush1.bf16.msra.mxu0 0
      %1204 = vmatprep.subr.bf16.mxu0 0
      %1205 = vmatpush1.bf16.msra.mxu0 0
      %1206 = vmatprep.subr.bf16.mxu0 0
      %1207 = vmatpush1.bf16.msra.mxu0 0
      %1208 = vmatprep.subr.bf16.mxu0 0
      %1209 = vmatpush1.bf16.msra.mxu0 0
      %1210 = vmatprep.subr.bf16.mxu0 0
      %1211 = vmatpush1.bf16.msra.mxu0 0
      %1212 = vmatprep.subr.bf16.mxu0 0
      %1213 = vmatpush1.bf16.msra.mxu0 0
      %1214 = vmatprep.mubr.bf16.mxu0 0
      %1215 = vmatmul.mubr.bf16.gmra.mrb[0].mxu0 %v1172
      %v1216 = vpop.f32.mrb[0].mxu0
      %v1217 = vadd.f32 0.0, %v1216
      %v1218 = vpop.f32.mrb[0].mxu0
      %v1219 = vpop.f32.mrb[0].mxu0
      %v1220 = vadd.f32 0.0, %v1219
      %v1221 = vpop.f32.mrb[0].mxu0
      %1222 = vmatprep.mubr.bf16.mxu0 0
      %1223 = vmatmul.mubr.bf16.gmra.mrb[0].mxu0 %v1173
      %v1224 = vpop.f32.mrb[0].mxu0
      %v1225 = vadd.f32 0.0, %v1224
      %v1226 = vpop.f32.mrb[0].mxu0
      %v1227 = vpop.f32.mrb[0].mxu0
      %v1228 = vpop.f32.mrb[0].mxu0
      %1229 = vdwg.mxu0
      %v1230 = vadd.f32 %v1010, %v1217
      %v1231 = vadd.f32 %v1011, %v1220
      %v1232 = vadd.f32 %v1012, %v1225
      %v1233 = vld [vmem:[%s12] sm:$0x1]
      %v1235 = vlaneseq
      %v1236 = vshrl.u32 %v1235, 7
      %v1237 = vsub.s32 0, %v1236
      %v1238 = vrot.slane %v1233, %v1237
      %v1240 = vadd.f32 %v1230, %v1238
      %v1241 = vadd.f32 %v1231, %v1238
      %v1242 = vadd.f32 %v1232, %v1238
      %1243 = vst.msk [vmem:[%s440] sm:$0xff] %vm447, %v1240
      %1244 = vst.msk [vmem:[%s440 + $0x8] sm:$0xff] %vm447, %v1241
      %1245 = vst.msk [vmem:[%s440 + $0x10] sm:$0xff] %vm447, %v1242
      %p1246 = scmp.lt.s32.totalorder %s24, 3
      %s1247 = scalar_select %p1246, %s24, 3
      %s1248 = smul.addr %s1247, 3
      %s1249 = smul.addr %s1248, 8
      %s1250 = scalar_lea.vmem %s13, %s1249
      // Predicated region
      $region73: #{det_model_forward.5} parent=71 // pred_check
        %p1251 = pneg %p320
      $region74: #{det_model_forward.5} parent=71 // pred_check_branch
        %1253 = sbr.rel (%p1251) target = $region76
      $region75: #{det_model_forward.5} parent=71 // pred_region
        _
      $region76: #{det_model_forward.5} parent=71 // pred_fallthru
        _
    $region72: #{det_model_forward.5} parent=5 // pred_fallthru
      _
    %p1254 = scmp.le.s32.totalorder 2, %s19
    // Predicated region
    $region77: #{det_model_forward.5} parent=5 // pred_check
      %p1255 = pneg %p1254
    $region78: #{det_model_forward.5} parent=5 // pred_check_branch
      %1257 = sbr.rel (%p1255) target = $region80
    $region79: #{det_model_forward.5} parent=5 // pred_region
      %s1258 = ssub.s32 %s19, 2
      // Predicated region
      $region81: #{det_model_forward.5} parent=79 // pred_check
        %p1259 = pneg %p326
      $region82: #{det_model_forward.5} parent=79 // pred_check_branch
        %1261 = sbr.rel (%p1259) target = $region84
      $region83: #{det_model_forward.5} parent=79 // pred_region
        %p1262 = scmp.lt.s32.totalorder %s25, 3
        %s1263 = scalar_select %p1262, %s25, 3
        %s1264 = smul.addr %s1263, 3
        %s1265 = smul.addr %s1264, 8
        %s1266 = scalar_lea.vmem %s13, %s1265
      $region84: #{det_model_forward.5} parent=79 // pred_fallthru
        _
    $region80: #{det_model_forward.5} parent=5 // pred_fallthru
      _
  $region6: #{det_model_forward.5} parent=0 // loop_footer
    %s23 = sadd.s32 1, %s19
  $region7: #{det_model_forward.5} parent=0 // loop_footer_branch
    %18 = sbr.rel target = $region3
  $region8: #{det_model_forward.5} parent=0 // loop_exit
    _

// kernel: det_model_forward.7
$region0: #{det_model_forward.7}
  #allocation0 [shape = 'u32[]', space=smem, size = 0x4, offset = 0x4, fixed_abs, tag = 'smem constant byte address 0x4 - core index']
  #allocation1 [shape = 'u32[144,128]{1,0:T(1,128)}', space=vmem, size = 0x12000, scoped, tag = 'internal scratch']
  %s0 = inlined_call_operand.vmem [shape: f32[4,32], index: 0, kind: input, shape index: {}]
  %s1 = inlined_call_operand.vmem [shape: f32[1,32], index: 1, kind: input, shape index: {}]
  %s2 = inlined_call_operand.vmem [shape: f32[1,32], index: 2, kind: input, shape index: {}]
  %s3 = inlined_call_operand.vmem [shape: f32[32,32], index: 3, kind: input, shape index: {}]
  %s4 = inlined_call_operand.vmem [shape: f32[1,32], index: 4, kind: input, shape index: {}]
  %s5 = inlined_call_operand.vmem [shape: f32[32,8], index: 5, kind: input, shape index: {}]
  %s6 = inlined_call_operand.vmem [shape: f32[1,8], index: 6, kind: input, shape index: {}]
  %s7 = inlined_call_operand.vmem [shape: f32[4,8], index: 7, kind: output, shape index: {}]
  %s8 = sld [smem:[#allocation0]]
  $region38: #{det_model_forward.7} parent=0
    _
  %s10 = ssub.s32 1, %s8
  %s11 = scalar_select 0, %s10, %s8
  // Predicated region
  $region2: #{det_model_forward.7} parent=0 // pred_check
    _
  $region3: #{det_model_forward.7} parent=0 // pred_check_branch
    %13 = sbr.rel (0) target = $region5
  $region4: #{det_model_forward.7} parent=0 // pred_region
    _
  $region5: #{det_model_forward.7} parent=0 // pred_fallthru
    _
  // Predicated region
  $region6: #{det_model_forward.7} parent=0 // pred_check
    _
  $region7: #{det_model_forward.7} parent=0 // pred_check_branch
    %15 = sbr.rel (0) target = $region9
  $region8: #{det_model_forward.7} parent=0 // pred_region
    _
  $region9: #{det_model_forward.7} parent=0 // pred_fallthru
    _
  // Predicated region
  $region10: #{det_model_forward.7} parent=0 // pred_check
    _
  $region11: #{det_model_forward.7} parent=0 // pred_check_branch
    %17 = sbr.rel (0) target = $region13
  $region12: #{det_model_forward.7} parent=0 // pred_region
    _
  $region13: #{det_model_forward.7} parent=0 // pred_fallthru
    _
  // Predicated region
  $region14: #{det_model_forward.7} parent=0 // pred_check
    _
  $region15: #{det_model_forward.7} parent=0 // pred_check_branch
    %19 = sbr.rel (0) target = $region17
  $region16: #{det_model_forward.7} parent=0 // pred_region
    _
  $region17: #{det_model_forward.7} parent=0 // pred_fallthru
    _
  // Predicated region
  $region18: #{det_model_forward.7} parent=0 // pred_check
    _
  $region19: #{det_model_forward.7} parent=0 // pred_check_branch
    %21 = sbr.rel (0) target = $region21
  $region20: #{det_model_forward.7} parent=0 // pred_region
    _
  $region21: #{det_model_forward.7} parent=0 // pred_fallthru
    _
  // Predicated region
  $region22: #{det_model_forward.7} parent=0 // pred_check
    _
  $region23: #{det_model_forward.7} parent=0 // pred_check_branch
    %23 = sbr.rel (0) target = $region25
  $region24: #{det_model_forward.7} parent=0 // pred_region
    _
  $region25: #{det_model_forward.7} parent=0 // pred_fallthru
    _
  // Predicated region
  $region26: #{det_model_forward.7} parent=0 // pred_check
    _
  $region27: #{det_model_forward.7} parent=0 // pred_check_branch
    %25 = sbr.rel (0) target = $region29
  $region28: #{det_model_forward.7} parent=0 // pred_region
    _
  $region29: #{det_model_forward.7} parent=0 // pred_fallthru
    _
  %v27 = vld [vmem:[%s0] sm:$0xf]
  %v28 = vld [vmem:[%s1] sm:$0x1]
  %v29 = vld [vmem:[%s2] sm:$0x1]
  %vm30 = vcmask 257024
  %v31 = vsel %vm30, %v27, 0.0
  %32 = vadd.xlane.f32.xlu0 %v31
  %v33 = vpop.xlane.xlu0 %32
  %v34 = vrcp.pop 32.0
  %v35 = vmul.f32 %v33, %v34
  %v36 = vsub.f32 %v27, %v35
  %v37 = vmul.f32 %v36, %v36
  %v38 = vsel %vm30, %v37, 0.0
  %39 = vadd.xlane.f32.xlu0 %v38
  %v40 = vpop.xlane.xlu0 %39
  %v41 = vmul.f32 %v40, %v34
  %v42 = vadd.f32 %v41, 1e-06
  %v43 = vrsqrt.pop %v42
  %v44 = vmul.f32 %v36, %v43
  %v46 = vlaneseq
  %v47 = vshrl.u32 %v46, 7
  %v48 = vsub.s32 0, %v47
  %v49 = vrot.slane %v28, %v48
  %v51 = vmul.f32 %v44, %v49
  %v53 = vlaneseq
  %v54 = vshrl.u32 %v53, 7
  %v55 = vsub.s32 0, %v54
  %v56 = vrot.slane %v29, %v55
  %v58 = vadd.f32 %v51, %v56
  %v59 = vld [vmem:[%s3] sm:$0xff]
  %v60 = vld [vmem:[%s3 + $0x8] sm:$0xff]
  %v61 = vld [vmem:[%s3 + $0x10] sm:$0xff]
  %v62 = vld [vmem:[%s3 + $0x18] sm:$0xff]
  %v63 = vpack.c.bf16 %v58, %v58
  %v64 = vpack.c.bf16 %v60, %v59
  %v65 = vpack.c.bf16 %v62, %v61
  %v66 = vld [vmem:[%s4] sm:$0x1]
  %v68 = vlaneseq
  %v69 = vshrl.u32 %v68, 7
  %v70 = vsub.s32 0, %v69
  %v71 = vrot.slane %v66, %v70
  %vm73 = vcmask 261120
  %v75 = vsel %vm73, %v63, 0
  %77 = vmatprep.subr.bf16.mxu0 0
  %78 = vmatpush1.bf16.msra.mxu0 %v64
  %79 = vmatprep.subr.bf16.mxu0 0
  %80 = vmatpush1.bf16.msra.mxu0 %v65
  %81 = vmatprep.subr.bf16.mxu0 0
  %82 = vmatpush1.bf16.msra.mxu0 0
  %83 = vmatprep.subr.bf16.mxu0 0
  %84 = vmatpush1.bf16.msra.mxu0 0
  %85 = vmatprep.subr.bf16.mxu0 0
  %86 = vmatpush1.bf16.msra.mxu0 0
  %87 = vmatprep.subr.bf16.mxu0 0
  %88 = vmatpush1.bf16.msra.mxu0 0
  %89 = vmatprep.subr.bf16.mxu0 0
  %90 = vmatpush1.bf16.msra.mxu0 0
  %91 = vmatprep.subr.bf16.mxu0 0
  %92 = vmatpush1.bf16.msra.mxu0 0
  %93 = vmatprep.subr.bf16.mxu0 0
  %94 = vmatpush1.bf16.msra.mxu0 0
  %95 = vmatprep.subr.bf16.mxu0 0
  %96 = vmatpush1.bf16.msra.mxu0 0
  %97 = vmatprep.subr.bf16.mxu0 0
  %98 = vmatpush1.bf16.msra.mxu0 0
  %99 = vmatprep.subr.bf16.mxu0 0
  %100 = vmatpush1.bf16.msra.mxu0 0
  %101 = vmatprep.subr.bf16.mxu0 0
  %102 = vmatpush1.bf16.msra.mxu0 0
  %103 = vmatprep.subr.bf16.mxu0 0
  %104 = vmatpush1.bf16.msra.mxu0 0
  %105 = vmatprep.subr.bf16.mxu0 0
  %106 = vmatpush1.bf16.msra.mxu0 0
  %107 = vmatprep.subr.bf16.mxu0 0
  %108 = vmatpush1.bf16.msra.mxu0 0
  %109 = vmatprep.mubr.bf16.mxu0 0
  %110 = vmatmul.mubr.bf16.gmra.mrb[0].mxu0 %v75
  %v111 = vpop.f32.mrb[0].mxu0
  %v112 = vadd.f32 %v71, %v111
  %v113 = vpop.f32.mrb[0].mxu0
  %v114 = vpop.f32.mrb[0].mxu0
  %v115 = vpop.f32.mrb[0].mxu0
  %116 = vdwg.mxu0
  %v117 = vmul.f32 %v112, 0.5
  %v118 = vmul.f32 %v112, 0.70710677
  %v119 = verf.f32.pop %v118
  %v120 = vadd.f32 %v119, 1.0
  %v121 = vmul.f32 %v117, %v120
  %v122 = vld [vmem:[%s5] sm:$0xff]
  %v123 = vld [vmem:[%s5 + $0x8] sm:$0xff]
  %v124 = vld [vmem:[%s5 + $0x10] sm:$0xff]
  %v125 = vld [vmem:[%s5 + $0x18] sm:$0xff]
  %v126 = vpack.c.bf16 %v121, %v121
  %v127 = vpack.c.bf16 %v123, %v122
  %v128 = vpack.c.bf16 %v125, %v124
  %v129 = vld [vmem:[%s6] sm:$0x1]
  %v131 = vlaneseq
  %v132 = vshrl.u32 %v131, 7
  %v133 = vsub.s32 0, %v132
  %v134 = vrot.slane %v129, %v133
  %v137 = vsel %vm73, %v126, 0
  %139 = vmatprep.subr.bf16.mxu0 0
  %140 = vmatpush1.bf16.msra.mxu0 %v127
  %141 = vmatprep.subr.bf16.mxu0 0
  %142 = vmatpush1.bf16.msra.mxu0 %v128
  %143 = vmatprep.subr.bf16.mxu0 0
  %144 = vmatpush1.bf16.msra.mxu0 0
  %145 = vmatprep.subr.bf16.mxu0 0
  %146 = vmatpush1.bf16.msra.mxu0 0
  %147 = vmatprep.subr.bf16.mxu0 0
  %148 = vmatpush1.bf16.msra.mxu0 0
  %149 = vmatprep.subr.bf16.mxu0 0
  %150 = vmatpush1.bf16.msra.mxu0 0
  %151 = vmatprep.subr.bf16.mxu0 0
  %152 = vmatpush1.bf16.msra.mxu0 0
  %153 = vmatprep.subr.bf16.mxu0 0
  %154 = vmatpush1.bf16.msra.mxu0 0
  %155 = vmatprep.subr.bf16.mxu0 0
  %156 = vmatpush1.bf16.msra.mxu0 0
  %157 = vmatprep.subr.bf16.mxu0 0
  %158 = vmatpush1.bf16.msra.mxu0 0
  %159 = vmatprep.subr.bf16.mxu0 0
  %160 = vmatpush1.bf16.msra.mxu0 0
  %161 = vmatprep.subr.bf16.mxu0 0
  %162 = vmatpush1.bf16.msra.mxu0 0
  %163 = vmatprep.subr.bf16.mxu0 0
  %164 = vmatpush1.bf16.msra.mxu0 0
  %165 = vmatprep.subr.bf16.mxu0 0
  %166 = vmatpush1.bf16.msra.mxu0 0
  %167 = vmatprep.subr.bf16.mxu0 0
  %168 = vmatpush1.bf16.msra.mxu0 0
  %169 = vmatprep.subr.bf16.mxu0 0
  %170 = vmatpush1.bf16.msra.mxu0 0
  %171 = vmatprep.mubr.bf16.mxu0 0
  %172 = vmatmul.mubr.bf16.gmra.mrb[0].mxu0 %v137
  %v173 = vpop.f32.mrb[0].mxu0
  %v174 = vadd.f32 %v134, %v173
  %v175 = vpop.f32.mrb[0].mxu0
  %v176 = vpop.f32.mrb[0].mxu0
  %v177 = vpop.f32.mrb[0].mxu0
  %178 = vdwg.mxu0
  %vm179 = vcmask 60416
  %180 = vst.msk [vmem:[%s7] sm:$0xf] %vm179, %v174
  // Predicated region
  $region30: #{det_model_forward.7} parent=0 // pred_check
    _
  $region31: #{det_model_forward.7} parent=0 // pred_check_branch
    %182 = sbr.rel (0) target = $region33
  $region32: #{det_model_forward.7} parent=0 // pred_region
    _
  $region33: #{det_model_forward.7} parent=0 // pred_fallthru
    _
  // Predicated region
  $region34: #{det_model_forward.7} parent=0 // pred_check
    _
  $region35: #{det_model_forward.7} parent=0 // pred_check_branch
    %184 = sbr.rel (0) target = $region37
  $region36: #{det_model_forward.7} parent=0 // pred_region
    _
  $region37: #{det_model_forward.7} parent=0 // pred_fallthru
    _

</llo_original>
